<compile_context>
chip_gen: v7x
topology: tpu7x:2x2x1
jax: 0.10.0
libtpu: 0.0.40
codegen_flags: <defaults>
</compile_context>

<pallas_src>
import jax
import jax.numpy as jnp
from jax.experimental import pallas as pl
from jax.experimental.pallas import tpu as pltpu

RELU_SLOPE = 0.2
EPS = 1e-5  # nn.InstanceNorm2d default


# ---------------------------------------------------------------------------
# Elementwise math shared by kernel and reference (pure jnp, lowers in Mosaic)
# ---------------------------------------------------------------------------
def _gelu(x):
    # tanh-form GELU (single EUP tanh); |err| vs PyTorch's exact erf GELU < 1e-3.
    c = 0.7978845608028654  # sqrt(2/pi)
    return 0.5 * x * (1.0 + jnp.tanh(c * (x + 0.044715 * x * x * x)))


def _lrelu(x):
    return jnp.where(x >= 0, x, RELU_SLOPE * x)


def _frn(x):
    g = _gelu(x)
    out1 = 0.5267 * _lrelu(x)
    out2 = 0.4733 * g
    out3 = 0.5497 * g
    return 0.4591 * _lrelu(out1 + out2) + out3


# ---------------------------------------------------------------------------
# Fused Pallas kernel: processes a PAIR of images per grid step.
# Activations are lane-dense (rows, W*Cout); the two images are stacked along
# rows (M) for the convs and packed side-by-side in lanes for the down output.
# ---------------------------------------------------------------------------
def unet_pair_kernel(x_ref, t1u_ref, t1m_ref, t1d_ref, b1e_ref,
                     g_ref, bt_ref, w2_ref, b2_ref, w4_ref,
                     out_ref, down_ref):
    f32 = jnp.float32
    M, WCin = x_ref.shape            # M = 2*H rows (two images)
    H = M // 2
    WC = out_ref.shape[-1]           # W*Cout = 128 (lane-dense)
    C = g_ref.shape[-1]              # Cout
    W = WC // C
    Ho = down_ref.shape[0]           # H // 2

    x = x_ref[...]                                        # (2H, W*Cin)
    x0, x1 = x[:H], x[H:]
    zin = jnp.zeros((1, WCin), f32)

    # ---- conv_1 (3x3, pad 1) + identity (1x1), three accumulated Toeplitz
    #      matmuls; the W padding lives inside the band weights, so no lane
    #      shifting of activations is needed.  Row shifts are per image.
    up1 = jnp.concatenate([zin, x0[:H - 1], zin, x1[:H - 1]], axis=0)   # x[h-1]
    dn1 = jnp.concatenate([x0[1:], zin, x1[1:], zin], axis=0)           # x[h+1]
    a1e = (jnp.dot(up1, t1u_ref[...], preferred_element_type=f32)
           + jnp.dot(x, t1m_ref[...], preferred_element_type=f32)
           + jnp.dot(dn1, t1d_ref[...], preferred_element_type=f32)
           + b1e_ref[...])                                # (2H, 2*WC)
    a1 = a1e[:, :WC]                                      # conv_1(x) + b1
    ident = a1e[:, WC:]                                   # identity(x) + bid

    # ---- HIN: per-image InstanceNorm2d(affine) on the first C//2 channels ---
    # 0/1 fold/expand/mask matrices built in-kernel (no input DMAs).
    fold = ((jax.lax.broadcasted_iota(jnp.int32, (WC, C), 0) % C)
            == jax.lax.broadcasted_iota(jnp.int32, (WC, C), 1)).astype(f32)
    expand = ((jax.lax.broadcasted_iota(jnp.int32, (C, WC), 1) % C)
              == jax.lax.broadcasted_iota(jnp.int32, (C, WC), 0)).astype(f32)
    hmask = (jax.lax.broadcasted_iota(jnp.int32, (1, C), 1) < C // 2).astype(f32)

    inv_hw = 1.0 / float(H * W)
    sq = a1 * a1
    stats = jnp.concatenate(
        [jnp.sum(a1[:H], axis=0, keepdims=True),          # per-image lane sums
         jnp.sum(a1[H:], axis=0, keepdims=True),
         jnp.sum(sq[:H], axis=0, keepdims=True),
         jnp.sum(sq[H:], axis=0, keepdims=True)], axis=0)  # (4, WC)
    folded = jnp.dot(stats, fold, preferred_element_type=f32)   # (4, C)
    mean = folded[0:2] * inv_hw                            # (2, C) per image
    var = jnp.maximum(folded[2:4] * inv_hw - mean * mean, 0.0)
    gi = g_ref[...] * jax.lax.rsqrt(var + EPS)             # (2, C)
    sc_sh = jnp.concatenate([hmask * gi + (1.0 - hmask),   # per-channel scale
                             hmask * (bt_ref[...] - mean * gi)],  # and shift
                            axis=0)                        # (4, C)
    ss = jnp.dot(sc_sh, expand, preferred_element_type=f32)  # (4, WC)
    act1 = _frn(jnp.concatenate([a1[:H] * ss[0:1] + ss[2:3],
                                 a1[H:] * ss[1:2] + ss[3:4]], axis=0))  # (2H, WC)

    # ---- conv_2 (3x3, pad 1): one matmul, K blocks fall on 128-lane
    #      boundaries; then FRN, then + identity(x) (module order preserved).
    zc = jnp.zeros((1, WC), f32)
    c0, c1 = act1[:H], act1[H:]
    up2 = jnp.concatenate([zc, c0[:H - 1], zc, c1[:H - 1]], axis=0)
    dn2 = jnp.concatenate([c0[1:], zc, c1[1:], zc], axis=0)
    p2 = jnp.concatenate([up2, act1, dn2], axis=1)         # (2H, 3*WC), aligned
    out = _frn(jnp.dot(p2, w2_ref[...], preferred_element_type=f32)
               + b2_ref[...]) + ident                      # (2H, WC)
    out_ref[...] = out                                     # full-lane stores

    # ---- downsample: 4x4, stride 2, pad 1, no bias.  Even/odd rows come from
    #      strided sublane loads of out_ref (no one-hot gather matmul); the two
    #      images are packed in lanes so the (8,128) down store is lane-dense.
    e0 = out_ref[pl.ds(0, Ho, stride=2), :]        # img0 rows 0,2,...,H-2
    o0 = out_ref[pl.ds(1, Ho, stride=2), :]        # img0 rows 1,3,...,H-1
    e1 = out_ref[pl.ds(H, Ho, stride=2), :]        # img1 even rows
    o1 = out_ref[pl.ds(H + 1, Ho, stride=2), :]    # img1 odd rows
    zr = jnp.zeros((1, WC), f32)

    def slab(ev, od, dy):                          # rows 2*ho + dy - 1
        if dy == 0:
            return jnp.concatenate([zr, od[:Ho - 1]], axis=0)
        if dy == 1:
            return ev
        if dy == 2:
            return od
        return jnp.concatenate([ev[1:], zr], axis=0)

    p4 = jnp.concatenate(
        [jnp.concatenate([slab(e0, o0, dy), slab(e1, o1, dy)], axis=1)
         for dy in range(4)], axis=1)              # (Ho, 8*WC) = (8, 1024), aligned
    down_ref[...] = jnp.dot(p4, w4_ref[...], preferred_element_type=f32)  # (8, 128)


# ---------------------------------------------------------------------------
# Wrapper-side weight lowering: band-Toeplitz matrices, lane-tiled biases.
# ---------------------------------------------------------------------------
def _lower_params(params, W):
    f32 = jnp.float32
    w1, w2, w4, wid = params["w1"], params["w2"], params["w4"], params["wid"]
    Cin, C = w1.shape[2], w1.shape[3]
    Wo = W // 2
    WC = W * C

    wi = jnp.arange(W)
    # 3x3 stride-1 pad-1: input column wi feeds output column wo at tap dx iff
    # wi == wo + dx - 1 (boundary zeros handled by "no match").
    sel3 = (wi[None, :, None] ==
            (jnp.arange(W)[None, None, :] + jnp.arange(3)[:, None, None] - 1)
            ).astype(f32)                                            # (3, W, W)
    # 4x4 stride-2 pad-1: wi == 2*wo + dx - 1
    sel4 = (wi[None, :, None] ==
            (2 * jnp.arange(Wo)[None, None, :] + jnp.arange(4)[:, None, None] - 1)
            ).astype(f32)                                            # (4, W, Wo)

    # Per-dy conv_1 / conv_2 band weights (rows: wi*Ci+ci, cols: wo*C+co).
    T1 = [jnp.einsum("xiw,xco->icwo", sel3, w1[dy]).reshape(W * Cin, WC)
          for dy in range(3)]
    T2 = [jnp.einsum("xiw,xco->icwo", sel3, w2[dy]).reshape(WC, WC)
          for dy in range(3)]
    B2 = jnp.concatenate(T2, axis=0)                                 # (3*WC, WC)

    # identity 1x1 conv, folded into conv_1's extra output lanes (mid tap only)
    Bid = jnp.einsum("iw,co->icwo", jnp.eye(W, dtype=f32), wid).reshape(W * Cin, WC)
    zcol = jnp.zeros((W * Cin, WC), f32)
    T1e_u = jnp.concatenate([T1[0], zcol], axis=1)                   # (W*Cin, 2*WC)
    T1e_m = jnp.concatenate([T1[1], Bid], axis=1)
    T1e_d = jnp.concatenate([T1[2], zcol], axis=1)

    def lane_bias(b):
        return jnp.tile(b.reshape(1, C), (1, W))                     # (1, WC)

    b1e = jnp.concatenate([lane_bias(params["b1"]), lane_bias(params["bid"])],
                          axis=1)                                    # (1, 2*WC)
    b2l = lane_bias(params["b2"])                                    # (1, WC)

    # Down-conv weights, pair-packed block-diagonal: LHS rows are
    # (dy, image-in-pair, wi*C+ci), output lanes are (image-in-pair, wo*C+co).
    blocks = []
    for dy in range(4):
        d = jnp.einsum("xiw,xco->icwo", sel4, w4[dy]).reshape(WC, Wo * C)
        dp = jnp.zeros((2 * WC, 2 * Wo * C), f32)
        dp = dp.at[:WC, :Wo * C].set(d).at[WC:, Wo * C:].set(d)
        blocks.append(dp)
    B4 = jnp.concatenate(blocks, axis=0)                             # (8*WC, 2*Wo*C)

    ch = C // 2
    zpad = jnp.zeros((1, C - ch), f32)
    gamma_p = jnp.concatenate([params["gamma"].reshape(1, ch), zpad], axis=1)
    beta_p = jnp.concatenate([params["beta"].reshape(1, ch), zpad], axis=1)

    return [T1e_u, T1e_m, T1e_d, b1e, gamma_p, beta_p, B2, b2l, B4]


def unet_conv_block(x_nchw, params):
    """Forward of UNetConvBlock (downsample=True, use_HIN=True, enc=dec=None).

    Returns (out_down, out) in NCHW, matching the PyTorch module.
    """
    N, Cin, H, W = x_nchw.shape
    C = params["w1"].shape[-1]
    Ho, Wo = H // 2, W // 2
    WC = W * C

    # Pad the batch to an even number of images (pairs per grid step).
    Np = N + (N % 2)
    if Np != N:
        x_nchw = jnp.concatenate(
            [x_nchw, jnp.zeros((Np - N, Cin, H, W), x_nchw.dtype)], axis=0)
    npairs = Np // 2

    # NCHW -> lane-dense rows, images stacked along rows: (Np*H, W*Cin)
    x2d = jnp.transpose(x_nchw, (0, 2, 3, 1)).reshape(Np * H, W * Cin)
    x2d = x2d.astype(jnp.float32)
    ops = _lower_params(params, W)

    out_shape = (jax.ShapeDtypeStruct((Np * H, WC), jnp.float32),
                 jax.ShapeDtypeStruct((npairs * Ho, 2 * Wo * C), jnp.float32))
    in_specs = [pl.BlockSpec((2 * H, W * Cin), lambda i: (i, 0))]
    in_specs += [pl.BlockSpec(o.shape, lambda i: (0, 0)) for o in ops]
    out_specs = (pl.BlockSpec((2 * H, WC), lambda i: (i, 0)),
                 pl.BlockSpec((Ho, 2 * Wo * C), lambda i: (i, 0)))

    out2d, down2d = pl.pallas_call(
        unet_pair_kernel,
        out_shape=out_shape,
        grid=(npairs,),
        in_specs=in_specs,
        out_specs=out_specs,
        compiler_params=pltpu.CompilerParams(
            dimension_semantics=("parallel",)),
    )(x2d, *ops)

    out = jnp.transpose(out2d.reshape(Np, H, W, C), (0, 3, 1, 2))[:N]
    down = down2d.reshape(npairs, Ho, 2, Wo, C)          # lanes: (img-in-pair, wo, co)
    down = jnp.transpose(down, (0, 2, 4, 1, 3)).reshape(Np, C, Ho, Wo)[:N]
    return down, out


# ---------------------------------------------------------------------------
# Pure-JAX reference (PyTorch semantics, NCHW) for a sanity check
# ---------------------------------------------------------------------------
def ref_block(x_nchw, params):
    dn = ("NCHW", "OIHW", "NCHW")
    prec = jax.lax.Precision.HIGHEST

    def conv(x, w_hwio, stride, pad):
        w = jnp.transpose(w_hwio, (3, 2, 0, 1))
        return jax.lax.conv_general_dilated(
            x, w, (stride, stride), ((pad, pad), (pad, pad)),
            dimension_numbers=dn, precision=prec)

    out = conv(x_nchw, params["w1"], 1, 1) + params["b1"].reshape(1, -1, 1, 1)
    c = out.shape[1] // 2
    o1, o2 = out[:, :c], out[:, c:]
    mean = jnp.mean(o1, axis=(2, 3), keepdims=True)
    var = jnp.mean((o1 - mean) ** 2, axis=(2, 3), keepdims=True)
    o1 = (o1 - mean) / jnp.sqrt(var + EPS)
    o1 = (o1 * params["gamma"].reshape(1, -1, 1, 1)
          + params["beta"].reshape(1, -1, 1, 1))
    out = _frn(jnp.concatenate([o1, o2], axis=1))
    out = _frn(conv(out, params["w2"], 1, 1) + params["b2"].reshape(1, -1, 1, 1))
    ident = jnp.einsum("nchw,co->nohw", x_nchw, params["wid"],
                       precision=prec) + params["bid"].reshape(1, -1, 1, 1)
    out = out + ident
    out_down = conv(out, params["w4"], 2, 1)
    return out_down, out


# ---------------------------------------------------------------------------
if __name__ == "__main__":
    N, Cin, Cout, H, W = 2, 4, 8, 16, 16
    key = jax.random.PRNGKey(0)
    ks = jax.random.split(key, 10)

    params = {
        "w1":    0.2 * jax.random.normal(ks[0], (3, 3, Cin, Cout), jnp.float32),
        "b1":    0.1 * jax.random.normal(ks[1], (1, Cout), jnp.float32),
        "w2":    0.2 * jax.random.normal(ks[2], (3, 3, Cout, Cout), jnp.float32),
        "b2":    0.1 * jax.random.normal(ks[3], (1, Cout), jnp.float32),
        "wid":   0.2 * jax.random.normal(ks[4], (Cin, Cout), jnp.float32),
        "bid":   0.1 * jax.random.normal(ks[5], (1, Cout), jnp.float32),
        "gamma": 1.0 + 0.1 * jax.random.normal(ks[6], (1, Cout // 2), jnp.float32),
        "beta":  0.1 * jax.random.normal(ks[7], (1, Cout // 2), jnp.float32),
        "w4":    0.2 * jax.random.normal(ks[8], (4, 4, Cout, Cout), jnp.float32),
    }

    x = jax.random.normal(ks[9], (N, Cin, H, W), jnp.float32)  # NCHW, like PyTorch

    fwd = jax.jit(unet_conv_block)
    out_down, out = fwd(x, params)
    jax.block_until_ready((out_down, out))

    assert out.shape == (N, Cout, H, W)
    assert out_down.shape == (N, Cout, H // 2, W // 2)

    ref_down, ref_out = jax.jit(ref_block)(x, params)
    jax.block_until_ready((ref_down, ref_out))
    err_out = float(jnp.max(jnp.abs(out - ref_out)))
    err_down = float(jnp.max(jnp.abs(out_down - ref_down)))
    assert err_out < 5e-2 and err_down < 5e-2, (err_out, err_down)

    print("KERNEL_OK")
</pallas_src>

<mosaic_0001>
module attributes {stable_mosaic.version = 11 : i64} {
  func.func @unet_pair_kernel(%arg0: i32, %arg1: memref<32x64xf32, #tpu.memory_space<vmem>>, %arg2: memref<64x256xf32, #tpu.memory_space<vmem>>, %arg3: memref<64x256xf32, #tpu.memory_space<vmem>>, %arg4: memref<64x256xf32, #tpu.memory_space<vmem>>, %arg5: memref<1x256xf32, #tpu.memory_space<vmem>>, %arg6: memref<1x8xf32, #tpu.memory_space<vmem>>, %arg7: memref<1x8xf32, #tpu.memory_space<vmem>>, %arg8: memref<384x128xf32, #tpu.memory_space<vmem>>, %arg9: memref<1x128xf32, #tpu.memory_space<vmem>>, %arg10: memref<1024x128xf32, #tpu.memory_space<vmem>>, %arg11: memref<32x128xf32, #tpu.memory_space<vmem>>, %arg12: memref<8x128xf32, #tpu.memory_space<vmem>>) attributes {dimension_semantics = [#tpu.dimension_semantics<parallel>], iteration_bounds = array<i64: 1>, scalar_prefetch = 0 : i64, scratch_operands = 0 : i64, tpu.core_type = #tpu.core_type<tc>, window_params = [{transform_indices = @transform_0, window_bounds = array<i64: 32, 64>}, {pipeline_mode = #tpu.pipeline_mode<synchronous>, transform_indices = @transform_1, window_bounds = array<i64: 64, 256>}, {pipeline_mode = #tpu.pipeline_mode<synchronous>, transform_indices = @transform_2, window_bounds = array<i64: 64, 256>}, {pipeline_mode = #tpu.pipeline_mode<synchronous>, transform_indices = @transform_3, window_bounds = array<i64: 64, 256>}, {pipeline_mode = #tpu.pipeline_mode<synchronous>, transform_indices = @transform_4, window_bounds = array<i64: 1, 256>}, {pipeline_mode = #tpu.pipeline_mode<synchronous>, transform_indices = @transform_5, window_bounds = array<i64: 1, 8>}, {pipeline_mode = #tpu.pipeline_mode<synchronous>, transform_indices = @transform_6, window_bounds = array<i64: 1, 8>}, {pipeline_mode = #tpu.pipeline_mode<synchronous>, transform_indices = @transform_7, window_bounds = array<i64: 384, 128>}, {pipeline_mode = #tpu.pipeline_mode<synchronous>, transform_indices = @transform_8, window_bounds = array<i64: 1, 128>}, {pipeline_mode = #tpu.pipeline_mode<synchronous>, transform_indices = @transform_9, window_bounds = array<i64: 1024, 128>}, {transform_indices = @transform_10, window_bounds = array<i64: 32, 128>}, {transform_indices = @transform_11, window_bounds = array<i64: 8, 128>}]} {
    %c0 = arith.constant 0 : index
    %c0_0 = arith.constant 0 : index
    %0 = vector.load %arg1[%c0, %c0_0] : memref<32x64xf32, #tpu.memory_space<vmem>>, vector<32x64xf32>
    %1 = vector.extract_strided_slice %0 {offsets = [0, 0], sizes = [16, 64], strides = [1, 1]} : vector<32x64xf32> to vector<16x64xf32>
    %2 = vector.extract_strided_slice %0 {offsets = [16, 0], sizes = [16, 64], strides = [1, 1]} : vector<32x64xf32> to vector<16x64xf32>
    %cst = arith.constant 0.000000e+00 : f32
    %3 = vector.broadcast %cst : f32 to vector<1x64xf32>
    %4 = vector.extract_strided_slice %1 {offsets = [0, 0], sizes = [15, 64], strides = [1, 1]} : vector<16x64xf32> to vector<15x64xf32>
    %5 = vector.extract_strided_slice %2 {offsets = [0, 0], sizes = [15, 64], strides = [1, 1]} : vector<16x64xf32> to vector<15x64xf32>
    %6 = tpu.concatenate %3, %4, %3, %5 in 0 : vector<1x64xf32>, vector<15x64xf32>, vector<1x64xf32>, vector<15x64xf32> -> vector<32x64xf32>
    %7 = vector.extract_strided_slice %1 {offsets = [1, 0], sizes = [15, 64], strides = [1, 1]} : vector<16x64xf32> to vector<15x64xf32>
    %8 = vector.extract_strided_slice %2 {offsets = [1, 0], sizes = [15, 64], strides = [1, 1]} : vector<16x64xf32> to vector<15x64xf32>
    %9 = tpu.concatenate %7, %3, %8, %3 in 0 : vector<15x64xf32>, vector<1x64xf32>, vector<15x64xf32>, vector<1x64xf32> -> vector<32x64xf32>
    %c0_1 = arith.constant 0 : index
    %c0_2 = arith.constant 0 : index
    %10 = vector.load %arg2[%c0_1, %c0_2] : memref<64x256xf32, #tpu.memory_space<vmem>>, vector<64x256xf32>
    %cst_3 = arith.constant dense<0.000000e+00> : vector<32x256xf32>
    %11 = tpu.matmul %6, %10, %cst_3 {dimension_numbers = #tpu.dot_dimension_numbers<[1], [0], [0], [1], [0, 0, 1, 1], [], []>} : vector<32x64xf32>, vector<64x256xf32>, vector<32x256xf32> -> vector<32x256xf32>
    %c0_4 = arith.constant 0 : index
    %c0_5 = arith.constant 0 : index
    %12 = vector.load %arg3[%c0_4, %c0_5] : memref<64x256xf32, #tpu.memory_space<vmem>>, vector<64x256xf32>
    %cst_6 = arith.constant dense<0.000000e+00> : vector<32x256xf32>
    %13 = tpu.matmul %0, %12, %cst_6 {dimension_numbers = #tpu.dot_dimension_numbers<[1], [0], [0], [1], [0, 0, 1, 1], [], []>} : vector<32x64xf32>, vector<64x256xf32>, vector<32x256xf32> -> vector<32x256xf32>
    %14 = arith.addf %11, %13 : vector<32x256xf32>
    %c0_7 = arith.constant 0 : index
    %c0_8 = arith.constant 0 : index
    %15 = vector.load %arg4[%c0_7, %c0_8] : memref<64x256xf32, #tpu.memory_space<vmem>>, vector<64x256xf32>
    %cst_9 = arith.constant dense<0.000000e+00> : vector<32x256xf32>
    %16 = tpu.matmul %9, %15, %cst_9 {dimension_numbers = #tpu.dot_dimension_numbers<[1], [0], [0], [1], [0, 0, 1, 1], [], []>} : vector<32x64xf32>, vector<64x256xf32>, vector<32x256xf32> -> vector<32x256xf32>
    %17 = arith.addf %14, %16 : vector<32x256xf32>
    %c0_10 = arith.constant 0 : index
    %c0_11 = arith.constant 0 : index
    %18 = vector.load %arg5[%c0_10, %c0_11] : memref<1x256xf32, #tpu.memory_space<vmem>>, vector<1x256xf32>
    %19 = vector.broadcast %18 : vector<1x256xf32> to vector<32x256xf32>
    %20 = arith.addf %17, %19 : vector<32x256xf32>
    %21 = vector.extract_strided_slice %20 {offsets = [0, 0], sizes = [32, 128], strides = [1, 1]} : vector<32x256xf32> to vector<32x128xf32>
    %22 = vector.extract_strided_slice %20 {offsets = [0, 128], sizes = [32, 128], strides = [1, 1]} : vector<32x256xf32> to vector<32x128xf32>
    %23 = tpu.iota {dimensions = array<i32: 0>} : vector<128x8xi32>
    %c8_i32 = arith.constant 8 : i32
    %c0_i32 = arith.constant 0 : i32
    %24 = arith.cmpi eq, %c8_i32, %c0_i32 : i32
    %c1_i32 = arith.constant 1 : i32
    %25 = arith.select %24, %c1_i32, %c8_i32 : i32
    %26 = vector.broadcast %25 : i32 to vector<128x8xi32>
    %27 = arith.remsi %23, %26 : vector<128x8xi32>
    %c0_i32_12 = arith.constant 0 : i32
    %28 = vector.broadcast %c0_i32_12 : i32 to vector<128x8xi32>
    %29 = arith.cmpi ne, %27, %28 : vector<128x8xi32>
    %c0_i32_13 = arith.constant 0 : i32
    %30 = vector.broadcast %c0_i32_13 : i32 to vector<128x8xi32>
    %31 = arith.cmpi slt, %27, %30 : vector<128x8xi32>
    %c0_i32_14 = arith.constant 0 : i32
    %32 = arith.cmpi slt, %25, %c0_i32_14 : i32
    %33 = vector.broadcast %32 : i1 to vector<128x8xi1>
    %34 = vector.broadcast %33 : vector<128x8xi1> to vector<128x8xi1>
    %35 = arith.xori %31, %34 : vector<128x8xi1>
    %36 = arith.andi %35, %29 : vector<128x8xi1>
    %37 = vector.broadcast %25 : i32 to vector<128x8xi32>
    %38 = arith.addi %27, %37 : vector<128x8xi32>
    %39 = arith.select %36, %38, %27 : vector<128x8xi1>, vector<128x8xi32>
    %40 = tpu.iota {dimensions = array<i32: 1>} : vector<128x8xi32>
    %41 = arith.cmpi eq, %39, %40 : vector<128x8xi32>
    %42 = arith.extui %41 : vector<128x8xi1> to vector<128x8xi32>
    %43 = arith.sitofp %42 : vector<128x8xi32> to vector<128x8xf32>
    %44 = tpu.iota {dimensions = array<i32: 1>} : vector<8x128xi32>
    %c8_i32_15 = arith.constant 8 : i32
    %c0_i32_16 = arith.constant 0 : i32
    %45 = arith.cmpi eq, %c8_i32_15, %c0_i32_16 : i32
    %c1_i32_17 = arith.constant 1 : i32
    %46 = arith.select %45, %c1_i32_17, %c8_i32_15 : i32
    %47 = vector.broadcast %46 : i32 to vector<8x128xi32>
    %48 = arith.remsi %44, %47 : vector<8x128xi32>
    %c0_i32_18 = arith.constant 0 : i32
    %49 = vector.broadcast %c0_i32_18 : i32 to vector<8x128xi32>
    %50 = arith.cmpi ne, %48, %49 : vector<8x128xi32>
    %c0_i32_19 = arith.constant 0 : i32
    %51 = vector.broadcast %c0_i32_19 : i32 to vector<8x128xi32>
    %52 = arith.cmpi slt, %48, %51 : vector<8x128xi32>
    %c0_i32_20 = arith.constant 0 : i32
    %53 = arith.cmpi slt, %46, %c0_i32_20 : i32
    %54 = vector.broadcast %53 : i1 to vector<8x128xi1>
    %55 = vector.broadcast %54 : vector<8x128xi1> to vector<8x128xi1>
    %56 = arith.xori %52, %55 : vector<8x128xi1>
    %57 = arith.andi %56, %50 : vector<8x128xi1>
    %58 = vector.broadcast %46 : i32 to vector<8x128xi32>
    %59 = arith.addi %48, %58 : vector<8x128xi32>
    %60 = arith.select %57, %59, %48 : vector<8x128xi1>, vector<8x128xi32>
    %61 = tpu.iota {dimensions = array<i32: 0>} : vector<8x128xi32>
    %62 = arith.cmpi eq, %60, %61 : vector<8x128xi32>
    %63 = arith.extui %62 : vector<8x128xi1> to vector<8x128xi32>
    %64 = arith.sitofp %63 : vector<8x128xi32> to vector<8x128xf32>
    %65 = tpu.iota {dimensions = array<i32: 1>} : vector<1x8xi32>
    %c4_i32 = arith.constant 4 : i32
    %66 = vector.broadcast %c4_i32 : i32 to vector<1x8xi32>
    %67 = arith.cmpi slt, %65, %66 : vector<1x8xi32>
    %68 = arith.extui %67 : vector<1x8xi1> to vector<1x8xi32>
    %69 = arith.sitofp %68 : vector<1x8xi32> to vector<1x8xf32>
    %70 = arith.mulf %21, %21 : vector<32x128xf32>
    %71 = vector.extract_strided_slice %21 {offsets = [0, 0], sizes = [16, 128], strides = [1, 1]} : vector<32x128xf32> to vector<16x128xf32>
    %cst_21 = arith.constant dense<0.000000e+00> : vector<128xf32>
    %72 = vector.multi_reduction <add>, %71, %cst_21 [0] : vector<16x128xf32> to vector<128xf32>
    %73 = vector.shape_cast %72 : vector<128xf32> to vector<1x128xf32>
    %74 = vector.extract_strided_slice %21 {offsets = [16, 0], sizes = [16, 128], strides = [1, 1]} : vector<32x128xf32> to vector<16x128xf32>
    %cst_22 = arith.constant dense<0.000000e+00> : vector<128xf32>
    %75 = vector.multi_reduction <add>, %74, %cst_22 [0] : vector<16x128xf32> to vector<128xf32>
    %76 = vector.shape_cast %75 : vector<128xf32> to vector<1x128xf32>
    %77 = vector.extract_strided_slice %70 {offsets = [0, 0], sizes = [16, 128], strides = [1, 1]} : vector<32x128xf32> to vector<16x128xf32>
    %cst_23 = arith.constant dense<0.000000e+00> : vector<128xf32>
    %78 = vector.multi_reduction <add>, %77, %cst_23 [0] : vector<16x128xf32> to vector<128xf32>
    %79 = vector.shape_cast %78 : vector<128xf32> to vector<1x128xf32>
    %80 = vector.extract_strided_slice %70 {offsets = [16, 0], sizes = [16, 128], strides = [1, 1]} : vector<32x128xf32> to vector<16x128xf32>
    %cst_24 = arith.constant dense<0.000000e+00> : vector<128xf32>
    %81 = vector.multi_reduction <add>, %80, %cst_24 [0] : vector<16x128xf32> to vector<128xf32>
    %82 = vector.shape_cast %81 : vector<128xf32> to vector<1x128xf32>
    %83 = tpu.concatenate %73, %76, %79, %82 in 0 : vector<1x128xf32>, vector<1x128xf32>, vector<1x128xf32>, vector<1x128xf32> -> vector<4x128xf32>
    %cst_25 = arith.constant dense<0.000000e+00> : vector<4x8xf32>
    %84 = tpu.matmul %83, %43, %cst_25 {dimension_numbers = #tpu.dot_dimension_numbers<[1], [0], [0], [1], [0, 0, 1, 1], [], []>} : vector<4x128xf32>, vector<128x8xf32>, vector<4x8xf32> -> vector<4x8xf32>
    %85 = vector.extract_strided_slice %84 {offsets = [0, 0], sizes = [2, 8], strides = [1, 1]} : vector<4x8xf32> to vector<2x8xf32>
    %cst_26 = arith.constant 3.906250e-03 : f32
    %86 = vector.broadcast %cst_26 : f32 to vector<2x8xf32>
    %87 = arith.mulf %85, %86 : vector<2x8xf32>
    %88 = vector.extract_strided_slice %84 {offsets = [2, 0], sizes = [2, 8], strides = [1, 1]} : vector<4x8xf32> to vector<2x8xf32>
    %cst_27 = arith.constant 3.906250e-03 : f32
    %89 = vector.broadcast %cst_27 : f32 to vector<2x8xf32>
    %90 = arith.mulf %88, %89 : vector<2x8xf32>
    %91 = arith.mulf %87, %87 : vector<2x8xf32>
    %92 = arith.subf %90, %91 : vector<2x8xf32>
    %cst_28 = arith.constant 0.000000e+00 : f32
    %93 = vector.broadcast %cst_28 : f32 to vector<2x8xf32>
    %94 = arith.maximumf %92, %93 : vector<2x8xf32>
    %c0_29 = arith.constant 0 : index
    %c0_30 = arith.constant 0 : index
    %95 = vector.load %arg6[%c0_29, %c0_30] : memref<1x8xf32, #tpu.memory_space<vmem>>, vector<1x8xf32>
    %cst_31 = arith.constant 9.99999974E-6 : f32
    %96 = vector.broadcast %cst_31 : f32 to vector<2x8xf32>
    %97 = arith.addf %94, %96 : vector<2x8xf32>
    %98 = math.rsqrt %97 : vector<2x8xf32>
    %99 = vector.broadcast %95 : vector<1x8xf32> to vector<2x8xf32>
    %100 = arith.mulf %99, %98 : vector<2x8xf32>
    %101 = vector.broadcast %69 : vector<1x8xf32> to vector<2x8xf32>
    %102 = arith.mulf %101, %100 : vector<2x8xf32>
    %cst_32 = arith.constant 1.000000e+00 : f32
    %103 = vector.broadcast %cst_32 : f32 to vector<1x8xf32>
    %104 = arith.subf %103, %69 : vector<1x8xf32>
    %105 = vector.broadcast %104 : vector<1x8xf32> to vector<2x8xf32>
    %106 = arith.addf %102, %105 : vector<2x8xf32>
    %c0_33 = arith.constant 0 : index
    %c0_34 = arith.constant 0 : index
    %107 = vector.load %arg7[%c0_33, %c0_34] : memref<1x8xf32, #tpu.memory_space<vmem>>, vector<1x8xf32>
    %108 = arith.mulf %87, %100 : vector<2x8xf32>
    %109 = vector.broadcast %107 : vector<1x8xf32> to vector<2x8xf32>
    %110 = arith.subf %109, %108 : vector<2x8xf32>
    %111 = vector.broadcast %69 : vector<1x8xf32> to vector<2x8xf32>
    %112 = arith.mulf %111, %110 : vector<2x8xf32>
    %113 = tpu.concatenate %106, %112 in 0 : vector<2x8xf32>, vector<2x8xf32> -> vector<4x8xf32>
    %cst_35 = arith.constant dense<0.000000e+00> : vector<4x128xf32>
    %114 = tpu.matmul %113, %64, %cst_35 {dimension_numbers = #tpu.dot_dimension_numbers<[1], [0], [0], [1], [0, 0, 1, 1], [], []>} : vector<4x8xf32>, vector<8x128xf32>, vector<4x128xf32> -> vector<4x128xf32>
    %115 = vector.extract_strided_slice %21 {offsets = [0, 0], sizes = [16, 128], strides = [1, 1]} : vector<32x128xf32> to vector<16x128xf32>
    %116 = vector.extract_strided_slice %114 {offsets = [0, 0], sizes = [1, 128], strides = [1, 1]} : vector<4x128xf32> to vector<1x128xf32>
    %117 = vector.broadcast %116 : vector<1x128xf32> to vector<16x128xf32>
    %118 = arith.mulf %115, %117 : vector<16x128xf32>
    %119 = vector.extract_strided_slice %114 {offsets = [2, 0], sizes = [1, 128], strides = [1, 1]} : vector<4x128xf32> to vector<1x128xf32>
    %120 = vector.broadcast %119 : vector<1x128xf32> to vector<16x128xf32>
    %121 = arith.addf %118, %120 : vector<16x128xf32>
    %122 = vector.extract_strided_slice %21 {offsets = [16, 0], sizes = [16, 128], strides = [1, 1]} : vector<32x128xf32> to vector<16x128xf32>
    %123 = vector.extract_strided_slice %114 {offsets = [1, 0], sizes = [1, 128], strides = [1, 1]} : vector<4x128xf32> to vector<1x128xf32>
    %124 = vector.broadcast %123 : vector<1x128xf32> to vector<16x128xf32>
    %125 = arith.mulf %122, %124 : vector<16x128xf32>
    %126 = vector.extract_strided_slice %114 {offsets = [3, 0], sizes = [1, 128], strides = [1, 1]} : vector<4x128xf32> to vector<1x128xf32>
    %127 = vector.broadcast %126 : vector<1x128xf32> to vector<16x128xf32>
    %128 = arith.addf %125, %127 : vector<16x128xf32>
    %129 = tpu.concatenate %121, %128 in 0 : vector<16x128xf32>, vector<16x128xf32> -> vector<32x128xf32>
    %cst_36 = arith.constant 5.000000e-01 : f32
    %130 = vector.broadcast %cst_36 : f32 to vector<32x128xf32>
    %131 = arith.mulf %130, %129 : vector<32x128xf32>
    %cst_37 = arith.constant 4.471500e-02 : f32
    %132 = vector.broadcast %cst_37 : f32 to vector<32x128xf32>
    %133 = arith.mulf %132, %129 : vector<32x128xf32>
    %134 = arith.mulf %133, %129 : vector<32x128xf32>
    %135 = arith.mulf %134, %129 : vector<32x128xf32>
    %136 = arith.addf %129, %135 : vector<32x128xf32>
    %cst_38 = arith.constant 0.797884583 : f32
    %137 = vector.broadcast %cst_38 : f32 to vector<32x128xf32>
    %138 = arith.mulf %137, %136 : vector<32x128xf32>
    %139 = math.tanh %138 : vector<32x128xf32>
    %cst_39 = arith.constant 1.000000e+00 : f32
    %140 = vector.broadcast %cst_39 : f32 to vector<32x128xf32>
    %141 = arith.addf %140, %139 : vector<32x128xf32>
    %142 = arith.mulf %131, %141 : vector<32x128xf32>
    %cst_40 = arith.constant 0.000000e+00 : f32
    %143 = vector.broadcast %cst_40 : f32 to vector<32x128xf32>
    %144 = arith.cmpf oge, %129, %143 : vector<32x128xf32>
    %cst_41 = arith.constant 2.000000e-01 : f32
    %145 = vector.broadcast %cst_41 : f32 to vector<32x128xf32>
    %146 = arith.mulf %145, %129 : vector<32x128xf32>
    %147 = arith.select %144, %129, %146 : vector<32x128xi1>, vector<32x128xf32>
    %cst_42 = arith.constant 5.267000e-01 : f32
    %148 = vector.broadcast %cst_42 : f32 to vector<32x128xf32>
    %149 = arith.mulf %148, %147 : vector<32x128xf32>
    %cst_43 = arith.constant 4.733000e-01 : f32
    %150 = vector.broadcast %cst_43 : f32 to vector<32x128xf32>
    %151 = arith.mulf %150, %142 : vector<32x128xf32>
    %cst_44 = arith.constant 5.497000e-01 : f32
    %152 = vector.broadcast %cst_44 : f32 to vector<32x128xf32>
    %153 = arith.mulf %152, %142 : vector<32x128xf32>
    %154 = arith.addf %149, %151 : vector<32x128xf32>
    %cst_45 = arith.constant 0.000000e+00 : f32
    %155 = vector.broadcast %cst_45 : f32 to vector<32x128xf32>
    %156 = arith.cmpf oge, %154, %155 : vector<32x128xf32>
    %cst_46 = arith.constant 2.000000e-01 : f32
    %157 = vector.broadcast %cst_46 : f32 to vector<32x128xf32>
    %158 = arith.mulf %157, %154 : vector<32x128xf32>
    %159 = arith.select %156, %154, %158 : vector<32x128xi1>, vector<32x128xf32>
    %cst_47 = arith.constant 4.591000e-01 : f32
    %160 = vector.broadcast %cst_47 : f32 to vector<32x128xf32>
    %161 = arith.mulf %160, %159 : vector<32x128xf32>
    %162 = arith.addf %161, %153 : vector<32x128xf32>
    %cst_48 = arith.constant 0.000000e+00 : f32
    %163 = vector.broadcast %cst_48 : f32 to vector<1x128xf32>
    %164 = vector.extract_strided_slice %162 {offsets = [0, 0], sizes = [16, 128], strides = [1, 1]} : vector<32x128xf32> to vector<16x128xf32>
    %165 = vector.extract_strided_slice %162 {offsets = [16, 0], sizes = [16, 128], strides = [1, 1]} : vector<32x128xf32> to vector<16x128xf32>
    %166 = vector.extract_strided_slice %164 {offsets = [0, 0], sizes = [15, 128], strides = [1, 1]} : vector<16x128xf32> to vector<15x128xf32>
    %167 = vector.extract_strided_slice %165 {offsets = [0, 0], sizes = [15, 128], strides = [1, 1]} : vector<16x128xf32> to vector<15x128xf32>
    %168 = tpu.concatenate %163, %166, %163, %167 in 0 : vector<1x128xf32>, vector<15x128xf32>, vector<1x128xf32>, vector<15x128xf32> -> vector<32x128xf32>
    %169 = vector.extract_strided_slice %164 {offsets = [1, 0], sizes = [15, 128], strides = [1, 1]} : vector<16x128xf32> to vector<15x128xf32>
    %170 = vector.extract_strided_slice %165 {offsets = [1, 0], sizes = [15, 128], strides = [1, 1]} : vector<16x128xf32> to vector<15x128xf32>
    %171 = tpu.concatenate %169, %163, %170, %163 in 0 : vector<15x128xf32>, vector<1x128xf32>, vector<15x128xf32>, vector<1x128xf32> -> vector<32x128xf32>
    %172 = tpu.concatenate %168, %162, %171 in 1 : vector<32x128xf32>, vector<32x128xf32>, vector<32x128xf32> -> vector<32x384xf32>
    %c0_49 = arith.constant 0 : index
    %c0_50 = arith.constant 0 : index
    %173 = vector.load %arg8[%c0_49, %c0_50] : memref<384x128xf32, #tpu.memory_space<vmem>>, vector<384x128xf32>
    %cst_51 = arith.constant dense<0.000000e+00> : vector<32x128xf32>
    %174 = tpu.matmul %172, %173, %cst_51 {dimension_numbers = #tpu.dot_dimension_numbers<[1], [0], [0], [1], [0, 0, 1, 1], [], []>} : vector<32x384xf32>, vector<384x128xf32>, vector<32x128xf32> -> vector<32x128xf32>
    %c0_52 = arith.constant 0 : index
    %c0_53 = arith.constant 0 : index
    %175 = vector.load %arg9[%c0_52, %c0_53] : memref<1x128xf32, #tpu.memory_space<vmem>>, vector<1x128xf32>
    %176 = vector.broadcast %175 : vector<1x128xf32> to vector<32x128xf32>
    %177 = arith.addf %174, %176 : vector<32x128xf32>
    %cst_54 = arith.constant 5.000000e-01 : f32
    %178 = vector.broadcast %cst_54 : f32 to vector<32x128xf32>
    %179 = arith.mulf %178, %177 : vector<32x128xf32>
    %cst_55 = arith.constant 4.471500e-02 : f32
    %180 = vector.broadcast %cst_55 : f32 to vector<32x128xf32>
    %181 = arith.mulf %180, %177 : vector<32x128xf32>
    %182 = arith.mulf %181, %177 : vector<32x128xf32>
    %183 = arith.mulf %182, %177 : vector<32x128xf32>
    %184 = arith.addf %177, %183 : vector<32x128xf32>
    %cst_56 = arith.constant 0.797884583 : f32
    %185 = vector.broadcast %cst_56 : f32 to vector<32x128xf32>
    %186 = arith.mulf %185, %184 : vector<32x128xf32>
    %187 = math.tanh %186 : vector<32x128xf32>
    %cst_57 = arith.constant 1.000000e+00 : f32
    %188 = vector.broadcast %cst_57 : f32 to vector<32x128xf32>
    %189 = arith.addf %188, %187 : vector<32x128xf32>
    %190 = arith.mulf %179, %189 : vector<32x128xf32>
    %cst_58 = arith.constant 0.000000e+00 : f32
    %191 = vector.broadcast %cst_58 : f32 to vector<32x128xf32>
    %192 = arith.cmpf oge, %177, %191 : vector<32x128xf32>
    %cst_59 = arith.constant 2.000000e-01 : f32
    %193 = vector.broadcast %cst_59 : f32 to vector<32x128xf32>
    %194 = arith.mulf %193, %177 : vector<32x128xf32>
    %195 = arith.select %192, %177, %194 : vector<32x128xi1>, vector<32x128xf32>
    %cst_60 = arith.constant 5.267000e-01 : f32
    %196 = vector.broadcast %cst_60 : f32 to vector<32x128xf32>
    %197 = arith.mulf %196, %195 : vector<32x128xf32>
    %cst_61 = arith.constant 4.733000e-01 : f32
    %198 = vector.broadcast %cst_61 : f32 to vector<32x128xf32>
    %199 = arith.mulf %198, %190 : vector<32x128xf32>
    %cst_62 = arith.constant 5.497000e-01 : f32
    %200 = vector.broadcast %cst_62 : f32 to vector<32x128xf32>
    %201 = arith.mulf %200, %190 : vector<32x128xf32>
    %202 = arith.addf %197, %199 : vector<32x128xf32>
    %cst_63 = arith.constant 0.000000e+00 : f32
    %203 = vector.broadcast %cst_63 : f32 to vector<32x128xf32>
    %204 = arith.cmpf oge, %202, %203 : vector<32x128xf32>
    %cst_64 = arith.constant 2.000000e-01 : f32
    %205 = vector.broadcast %cst_64 : f32 to vector<32x128xf32>
    %206 = arith.mulf %205, %202 : vector<32x128xf32>
    %207 = arith.select %204, %202, %206 : vector<32x128xi1>, vector<32x128xf32>
    %cst_65 = arith.constant 4.591000e-01 : f32
    %208 = vector.broadcast %cst_65 : f32 to vector<32x128xf32>
    %209 = arith.mulf %208, %207 : vector<32x128xf32>
    %210 = arith.addf %209, %201 : vector<32x128xf32>
    %211 = arith.addf %210, %22 : vector<32x128xf32>
    %c0_66 = arith.constant 0 : index
    %c0_67 = arith.constant 0 : index
    %212 = vector.load %arg11[%c0_66, %c0_67] : memref<32x128xf32, #tpu.memory_space<vmem>>, vector<32x128xf32>
    tpu.vector_store %arg11[%c0_66, %c0_67], %211 {strides = array<i32>} : memref<32x128xf32, #tpu.memory_space<vmem>>, vector<32x128xf32>,
    %c0_68 = arith.constant 0 : index
    %c0_69 = arith.constant 0 : index
    %213 = tpu.strided_load %arg11[%c0_68, %c0_69] {strides = array<i32: 2, 1>} : memref<32x128xf32, #tpu.memory_space<vmem>>, vector<8x128xf32>
    %c1 = arith.constant 1 : index
    %c0_70 = arith.constant 0 : index
    %214 = tpu.strided_load %arg11[%c1, %c0_70] {strides = array<i32: 2, 1>} : memref<32x128xf32, #tpu.memory_space<vmem>>, vector<8x128xf32>
    %c16 = arith.constant 16 : index
    %c0_71 = arith.constant 0 : index
    %215 = tpu.strided_load %arg11[%c16, %c0_71] {strides = array<i32: 2, 1>} : memref<32x128xf32, #tpu.memory_space<vmem>>, vector<8x128xf32>
    %c17 = arith.constant 17 : index
    %c0_72 = arith.constant 0 : index
    %216 = tpu.strided_load %arg11[%c17, %c0_72] {strides = array<i32: 2, 1>} : memref<32x128xf32, #tpu.memory_space<vmem>>, vector<8x128xf32>
    %cst_73 = arith.constant 0.000000e+00 : f32
    %217 = vector.broadcast %cst_73 : f32 to vector<1x128xf32>
    %218 = vector.extract_strided_slice %214 {offsets = [0, 0], sizes = [7, 128], strides = [1, 1]} : vector<8x128xf32> to vector<7x128xf32>
    %219 = tpu.concatenate %217, %218 in 0 : vector<1x128xf32>, vector<7x128xf32> -> vector<8x128xf32>
    %220 = vector.extract_strided_slice %216 {offsets = [0, 0], sizes = [7, 128], strides = [1, 1]} : vector<8x128xf32> to vector<7x128xf32>
    %221 = tpu.concatenate %217, %220 in 0 : vector<1x128xf32>, vector<7x128xf32> -> vector<8x128xf32>
    %222 = tpu.concatenate %219, %221 in 1 : vector<8x128xf32>, vector<8x128xf32> -> vector<8x256xf32>
    %223 = tpu.concatenate %213, %215 in 1 : vector<8x128xf32>, vector<8x128xf32> -> vector<8x256xf32>
    %224 = tpu.concatenate %214, %216 in 1 : vector<8x128xf32>, vector<8x128xf32> -> vector<8x256xf32>
    %225 = vector.extract_strided_slice %213 {offsets = [1, 0], sizes = [7, 128], strides = [1, 1]} : vector<8x128xf32> to vector<7x128xf32>
    %226 = tpu.concatenate %225, %217 in 0 : vector<7x128xf32>, vector<1x128xf32> -> vector<8x128xf32>
    %227 = vector.extract_strided_slice %215 {offsets = [1, 0], sizes = [7, 128], strides = [1, 1]} : vector<8x128xf32> to vector<7x128xf32>
    %228 = tpu.concatenate %227, %217 in 0 : vector<7x128xf32>, vector<1x128xf32> -> vector<8x128xf32>
    %229 = tpu.concatenate %226, %228 in 1 : vector<8x128xf32>, vector<8x128xf32> -> vector<8x256xf32>
    %230 = tpu.concatenate %222, %223, %224, %229 in 1 : vector<8x256xf32>, vector<8x256xf32>, vector<8x256xf32>, vector<8x256xf32> -> vector<8x1024xf32>
    %c0_74 = arith.constant 0 : index
    %c0_75 = arith.constant 0 : index
    %231 = vector.load %arg10[%c0_74, %c0_75] : memref<1024x128xf32, #tpu.memory_space<vmem>>, vector<1024x128xf32>
    %cst_76 = arith.constant dense<0.000000e+00> : vector<8x128xf32>
    %232 = tpu.matmul %230, %231, %cst_76 {dimension_numbers = #tpu.dot_dimension_numbers<[1], [0], [0], [1], [0, 0, 1, 1], [], []>} : vector<8x1024xf32>, vector<1024x128xf32>, vector<8x128xf32> -> vector<8x128xf32>
    %c0_77 = arith.constant 0 : index
    %c0_78 = arith.constant 0 : index
    %233 = vector.load %arg12[%c0_77, %c0_78] : memref<8x128xf32, #tpu.memory_space<vmem>>, vector<8x128xf32>
    tpu.vector_store %arg12[%c0_77, %c0_78], %232 {strides = array<i32>} : memref<8x128xf32, #tpu.memory_space<vmem>>, vector<8x128xf32>,
    return
  }
  func.func @transform_0(%arg0: i32) -> (i32, i32) {
    %c0_i32 = arith.constant 0 : i32
    %c0_i32_0 = arith.constant 0 : i32
    return %arg0, %c0_i32 : i32, i32
  }
  func.func @transform_1(%arg0: i32) -> (i32, i32) {
    %c0_i32 = arith.constant 0 : i32
    %c0_i32_0 = arith.constant 0 : i32
    %c0_i32_1 = arith.constant 0 : i32
    return %c0_i32, %c0_i32_0 : i32, i32
  }
  func.func @transform_2(%arg0: i32) -> (i32, i32) {
    %c0_i32 = arith.constant 0 : i32
    %c0_i32_0 = arith.constant 0 : i32
    %c0_i32_1 = arith.constant 0 : i32
    return %c0_i32, %c0_i32_0 : i32, i32
  }
  func.func @transform_3(%arg0: i32) -> (i32, i32) {
    %c0_i32 = arith.constant 0 : i32
    %c0_i32_0 = arith.constant 0 : i32
    %c0_i32_1 = arith.constant 0 : i32
    return %c0_i32, %c0_i32_0 : i32, i32
  }
  func.func @transform_4(%arg0: i32) -> (i32, i32) {
    %c0_i32 = arith.constant 0 : i32
    %c0_i32_0 = arith.constant 0 : i32
    %c0_i32_1 = arith.constant 0 : i32
    return %c0_i32, %c0_i32_0 : i32, i32
  }
  func.func @transform_5(%arg0: i32) -> (i32, i32) {
    %c0_i32 = arith.constant 0 : i32
    %c0_i32_0 = arith.constant 0 : i32
    %c0_i32_1 = arith.constant 0 : i32
    return %c0_i32, %c0_i32_0 : i32, i32
  }
  func.func @transform_6(%arg0: i32) -> (i32, i32) {
    %c0_i32 = arith.constant 0 : i32
    %c0_i32_0 = arith.constant 0 : i32
    %c0_i32_1 = arith.constant 0 : i32
    return %c0_i32, %c0_i32_0 : i32, i32
  }
  func.func @transform_7(%arg0: i32) -> (i32, i32) {
    %c0_i32 = arith.constant 0 : i32
    %c0_i32_0 = arith.constant 0 : i32
    %c0_i32_1 = arith.constant 0 : i32
    return %c0_i32, %c0_i32_0 : i32, i32
  }
  func.func @transform_8(%arg0: i32) -> (i32, i32) {
    %c0_i32 = arith.constant 0 : i32
    %c0_i32_0 = arith.constant 0 : i32
    %c0_i32_1 = arith.constant 0 : i32
    return %c0_i32, %c0_i32_0 : i32, i32
  }
  func.func @transform_9(%arg0: i32) -> (i32, i32) {
    %c0_i32 = arith.constant 0 : i32
    %c0_i32_0 = arith.constant 0 : i32
    %c0_i32_1 = arith.constant 0 : i32
    return %c0_i32, %c0_i32_0 : i32, i32
  }
  func.func @transform_10(%arg0: i32) -> (i32, i32) {
    %c0_i32 = arith.constant 0 : i32
    %c0_i32_0 = arith.constant 0 : i32
    return %arg0, %c0_i32 : i32, i32
  }
  func.func @transform_11(%arg0: i32) -> (i32, i32) {
    %c0_i32 = arith.constant 0 : i32
    %c0_i32_0 = arith.constant 0 : i32
    return %arg0, %c0_i32 : i32, i32
  }
}

</mosaic_0001>

<llo_original>
// kernel: unet_conv_block.1
$region0: #{unet_conv_block.1}
  #allocation0 [shape = 'u32[]', space=smem, size = 0x4, offset = 0x4, fixed_abs, tag = 'smem constant byte address 0x4 - core index']
  #allocation1 [shape = 'u32[144,128]{1,0:T(1,128)}', space=vmem, size = 0x12000, scoped, tag = 'internal scratch']
  %s0 = inlined_call_operand.vmem [shape: f32[32,64], index: 0, kind: input, shape index: {}]
  %s1 = inlined_call_operand.vmem [shape: f32[64,256], index: 1, kind: input, shape index: {}]
  %s2 = inlined_call_operand.vmem [shape: f32[64,256], index: 2, kind: input, shape index: {}]
  %s3 = inlined_call_operand.vmem [shape: f32[64,256], index: 3, kind: input, shape index: {}]
  %s4 = inlined_call_operand.vmem [shape: f32[1,256], index: 4, kind: input, shape index: {}]
  %s5 = inlined_call_operand.vmem [shape: f32[1,8], index: 5, kind: input, shape index: {}]
  %s6 = inlined_call_operand.vmem [shape: f32[1,8], index: 6, kind: input, shape index: {}]
  %s7 = inlined_call_operand.vmem [shape: f32[384,128], index: 7, kind: input, shape index: {}]
  %s8 = inlined_call_operand.vmem [shape: f32[1,128], index: 8, kind: input, shape index: {}]
  %s9 = inlined_call_operand.vmem [shape: f32[1024,128], index: 9, kind: input, shape index: {}]
  %s10 = inlined_call_operand.vmem [shape: f32[32,128], index: 10, kind: output, shape index: {0}]
  %s11 = inlined_call_operand.vmem [shape: f32[8,128], index: 11, kind: output, shape index: {1}]
  %12 = xla_tuple %s10, %s11
  %s13 = sld [smem:[#allocation0]]
  $region58: #{unet_conv_block.1} parent=0
    _
  %s15 = ssub.s32 1, %s13
  %s16 = scalar_select 0, %s15, %s13
  // Predicated region
  $region2: #{unet_conv_block.1} parent=0 // pred_check
    _
  $region3: #{unet_conv_block.1} parent=0 // pred_check_branch
    %18 = sbr.rel (0) target = $region5
  $region4: #{unet_conv_block.1} parent=0 // pred_region
    _
  $region5: #{unet_conv_block.1} parent=0 // pred_fallthru
    _
  // Predicated region
  $region6: #{unet_conv_block.1} parent=0 // pred_check
    _
  $region7: #{unet_conv_block.1} parent=0 // pred_check_branch
    %20 = sbr.rel (0) target = $region9
  $region8: #{unet_conv_block.1} parent=0 // pred_region
    _
  $region9: #{unet_conv_block.1} parent=0 // pred_fallthru
    _
  // Predicated region
  $region10: #{unet_conv_block.1} parent=0 // pred_check
    _
  $region11: #{unet_conv_block.1} parent=0 // pred_check_branch
    %22 = sbr.rel (0) target = $region13
  $region12: #{unet_conv_block.1} parent=0 // pred_region
    _
  $region13: #{unet_conv_block.1} parent=0 // pred_fallthru
    _
  // Predicated region
  $region14: #{unet_conv_block.1} parent=0 // pred_check
    _
  $region15: #{unet_conv_block.1} parent=0 // pred_check_branch
    %24 = sbr.rel (0) target = $region17
  $region16: #{unet_conv_block.1} parent=0 // pred_region
    _
  $region17: #{unet_conv_block.1} parent=0 // pred_fallthru
    _
  // Predicated region
  $region18: #{unet_conv_block.1} parent=0 // pred_check
    _
  $region19: #{unet_conv_block.1} parent=0 // pred_check_branch
    %26 = sbr.rel (0) target = $region21
  $region20: #{unet_conv_block.1} parent=0 // pred_region
    _
  $region21: #{unet_conv_block.1} parent=0 // pred_fallthru
    _
  // Predicated region
  $region22: #{unet_conv_block.1} parent=0 // pred_check
    _
  $region23: #{unet_conv_block.1} parent=0 // pred_check_branch
    %28 = sbr.rel (0) target = $region25
  $region24: #{unet_conv_block.1} parent=0 // pred_region
    _
  $region25: #{unet_conv_block.1} parent=0 // pred_fallthru
    _
  // Predicated region
  $region26: #{unet_conv_block.1} parent=0 // pred_check
    _
  $region27: #{unet_conv_block.1} parent=0 // pred_check_branch
    %30 = sbr.rel (0) target = $region29
  $region28: #{unet_conv_block.1} parent=0 // pred_region
    _
  $region29: #{unet_conv_block.1} parent=0 // pred_fallthru
    _
  // Predicated region
  $region30: #{unet_conv_block.1} parent=0 // pred_check
    _
  $region31: #{unet_conv_block.1} parent=0 // pred_check_branch
    %32 = sbr.rel (0) target = $region33
  $region32: #{unet_conv_block.1} parent=0 // pred_region
    _
  $region33: #{unet_conv_block.1} parent=0 // pred_fallthru
    _
  // Predicated region
  $region34: #{unet_conv_block.1} parent=0 // pred_check
    _
  $region35: #{unet_conv_block.1} parent=0 // pred_check_branch
    %34 = sbr.rel (0) target = $region37
  $region36: #{unet_conv_block.1} parent=0 // pred_region
    _
  $region37: #{unet_conv_block.1} parent=0 // pred_fallthru
    _
  // Predicated region
  $region38: #{unet_conv_block.1} parent=0 // pred_check
    _
  $region39: #{unet_conv_block.1} parent=0 // pred_check_branch
    %36 = sbr.rel (0) target = $region41
  $region40: #{unet_conv_block.1} parent=0 // pred_region
    _
  $region41: #{unet_conv_block.1} parent=0 // pred_fallthru
    _
  %v37 = vld [vmem:[%s0] sm:$0xff]
  %v38 = vld [vmem:[%s0 + $0x8] sm:$0xff]
  %v39 = vld [vmem:[%s0 + $0x10] sm:$0xff]
  %v40 = vld [vmem:[%s0 + $0x18] sm:$0xff]
  %vm43 = vcmask 1040384
  %v44 = vrot.slane %v37, 7
  %v45 = vrot.slane %v38, 7
  %v46 = vsel %vm43, %v44, %v45
  %v50 = vrot.slane %v39, 7
  %v51 = vrot.slane %v40, 7
  %v52 = vsel %vm43, %v50, %v51
  %v54 = vsel %vm43, 0.0, %v44
  %v55 = vsel %vm43, 0.0, %v50
  %vm56 = vcmask 1046528
  %v57 = vrot.slane %v37, 1
  %v58 = vrot.slane %v38, 1
  %v59 = vsel %vm56, %v57, %v58
  %v61 = vrot.slane %v39, 1
  %v62 = vrot.slane %v40, 1
  %v63 = vsel %vm56, %v61, %v62
  %v65 = vsel %vm56, %v58, 0.0
  %v66 = vsel %vm56, %v62, 0.0
  %v67 = vld [vmem:[%s1] sm:$0xff]
  %v68 = vld [vmem:[%s1 + $0x8] sm:$0xff]
  %v69 = vld [vmem:[%s1 + $0x10] sm:$0xff]
  %v70 = vld [vmem:[%s1 + $0x18] sm:$0xff]
  %v71 = vld [vmem:[%s1 + $0x20] sm:$0xff]
  %v72 = vld [vmem:[%s1 + $0x28] sm:$0xff]
  %v73 = vld [vmem:[%s1 + $0x30] sm:$0xff]
  %v74 = vld [vmem:[%s1 + $0x38] sm:$0xff]
  %v75 = vld [vmem:[%s1 + $0x40] sm:$0xff]
  %v76 = vld [vmem:[%s1 + $0x48] sm:$0xff]
  %v77 = vld [vmem:[%s1 + $0x50] sm:$0xff]
  %v78 = vld [vmem:[%s1 + $0x58] sm:$0xff]
  %v79 = vld [vmem:[%s1 + $0x60] sm:$0xff]
  %v80 = vld [vmem:[%s1 + $0x68] sm:$0xff]
  %v81 = vld [vmem:[%s1 + $0x70] sm:$0xff]
  %v82 = vld [vmem:[%s1 + $0x78] sm:$0xff]
  %v83 = vld [vmem:[%s2] sm:$0xff]
  %v84 = vld [vmem:[%s2 + $0x8] sm:$0xff]
  %v85 = vld [vmem:[%s2 + $0x10] sm:$0xff]
  %v86 = vld [vmem:[%s2 + $0x18] sm:$0xff]
  %v87 = vld [vmem:[%s2 + $0x20] sm:$0xff]
  %v88 = vld [vmem:[%s2 + $0x28] sm:$0xff]
  %v89 = vld [vmem:[%s2 + $0x30] sm:$0xff]
  %v90 = vld [vmem:[%s2 + $0x38] sm:$0xff]
  %v91 = vld [vmem:[%s2 + $0x40] sm:$0xff]
  %v92 = vld [vmem:[%s2 + $0x48] sm:$0xff]
  %v93 = vld [vmem:[%s2 + $0x50] sm:$0xff]
  %v94 = vld [vmem:[%s2 + $0x58] sm:$0xff]
  %v95 = vld [vmem:[%s2 + $0x60] sm:$0xff]
  %v96 = vld [vmem:[%s2 + $0x68] sm:$0xff]
  %v97 = vld [vmem:[%s2 + $0x70] sm:$0xff]
  %v98 = vld [vmem:[%s2 + $0x78] sm:$0xff]
  %vm99 = vcmask 523264
  %v100 = vsel %vm99, %v37, 0
  %v102 = vsel %vm99, %v38, 0
  %v104 = vsel %vm99, %v39, 0
  %v106 = vsel %vm99, %v40, 0
  %108 = vmatprep.subr.mxu0 %v84
  %109 = vmatpush1.msra.mxu0 %v83
  %110 = vmatprep.subr.mxu0 %v86
  %111 = vmatpush1.msra.mxu0 %v85
  %112 = vmatprep.subr.mxu0 %v88
  %113 = vmatpush1.msra.mxu0 %v87
  %114 = vmatprep.subr.mxu0 %v90
  %115 = vmatpush1.msra.mxu0 %v89
  %116 = vmatprep.subr.mxu0 %v92
  %117 = vmatpush1.msra.mxu0 %v91
  %118 = vmatprep.subr.mxu0 %v94
  %119 = vmatpush1.msra.mxu0 %v93
  %120 = vmatprep.subr.mxu0 %v96
  %121 = vmatpush1.msra.mxu0 %v95
  %122 = vmatprep.subr.mxu0 %v98
  %123 = vmatpush1.msra.mxu0 %v97
  %124 = vmatprep.subr.mxu0 0.0
  %125 = vmatpush1.msra.mxu0 0.0
  %126 = vmatprep.subr.mxu0 0.0
  %127 = vmatpush1.msra.mxu0 0.0
  %128 = vmatprep.subr.mxu0 0.0
  %129 = vmatpush1.msra.mxu0 0.0
  %130 = vmatprep.subr.mxu0 0.0
  %131 = vmatpush1.msra.mxu0 0.0
  %132 = vmatprep.subr.mxu0 0.0
  %133 = vmatpush1.msra.mxu0 0.0
  %134 = vmatprep.subr.mxu0 0.0
  %135 = vmatpush1.msra.mxu0 0.0
  %136 = vmatprep.subr.mxu0 0.0
  %137 = vmatpush1.msra.mxu0 0.0
  %138 = vmatprep.subr.mxu0 0.0
  %139 = vmatpush1.msra.mxu0 0.0
  %140 = vmatprep.subr.mxu0 0.0
  %141 = vmatpush1.msra.mxu0 0.0
  %142 = vmatprep.subr.mxu0 0.0
  %143 = vmatpush1.msra.mxu0 0.0
  %144 = vmatprep.subr.mxu0 0.0
  %145 = vmatpush1.msra.mxu0 0.0
  %146 = vmatprep.subr.mxu0 0.0
  %147 = vmatpush1.msra.mxu0 0.0
  %148 = vmatprep.subr.mxu0 0.0
  %149 = vmatpush1.msra.mxu0 0.0
  %150 = vmatprep.subr.mxu0 0.0
  %151 = vmatpush1.msra.mxu0 0.0
  %152 = vmatprep.subr.mxu0 0.0
  %153 = vmatpush1.msra.mxu0 0.0
  %154 = vmatprep.subr.mxu0 0.0
  %155 = vmatpush1.msra.mxu0 0.0
  %156 = vmatprep.subr.mxu0 0.0
  %157 = vmatpush1.msra.mxu0 0.0
  %158 = vmatprep.subr.mxu0 0.0
  %159 = vmatpush1.msra.mxu0 0.0
  %160 = vmatprep.subr.mxu0 0.0
  %161 = vmatpush1.msra.mxu0 0.0
  %162 = vmatprep.subr.mxu0 0.0
  %163 = vmatpush1.msra.mxu0 0.0
  %164 = vmatprep.subr.mxu0 0.0
  %165 = vmatpush1.msra.mxu0 0.0
  %166 = vmatprep.subr.mxu0 0.0
  %167 = vmatpush1.msra.mxu0 0.0
  %168 = vmatprep.subr.mxu0 0.0
  %169 = vmatpush1.msra.mxu0 0.0
  %170 = vmatprep.subr.mxu0 0.0
  %171 = vmatpush1.msra.mxu0 0.0
  %172 = vmatprep.mubr.f32.mxu0 0.0
  %173 = vmatmul.mubr.f32.gmra.mrb[0].mxu0 %v100
  %v174 = vpop.f32.mrb[0].mxu0
  %v175 = vadd.f32 0.0, %v174
  %v176 = vpop.f32.mrb[0].mxu0
  %v177 = vadd.f32 0.0, %v176
  %178 = vmatprep.mubr.f32.mxu0 0.0
  %179 = vmatmul.mubr.f32.gmra.mrb[0].mxu0 %v102
  %v180 = vpop.f32.mrb[0].mxu0
  %v181 = vadd.f32 0.0, %v180
  %v182 = vpop.f32.mrb[0].mxu0
  %v183 = vadd.f32 0.0, %v182
  %184 = vmatprep.mubr.f32.mxu0 0.0
  %185 = vmatmul.mubr.f32.gmra.mrb[0].mxu0 %v104
  %v186 = vpop.f32.mrb[0].mxu0
  %v187 = vadd.f32 0.0, %v186
  %v188 = vpop.f32.mrb[0].mxu0
  %v189 = vadd.f32 0.0, %v188
  %190 = vmatprep.mubr.f32.mxu0 0.0
  %191 = vmatmul.mubr.f32.gmra.mrb[0].mxu0 %v106
  %v192 = vpop.f32.mrb[0].mxu0
  %v193 = vadd.f32 0.0, %v192
  %v194 = vpop.f32.mrb[0].mxu0
  %v195 = vadd.f32 0.0, %v194
  %196 = vdwg.mxu0
  %v198 = vsel %vm99, %v54, 0
  %v200 = vsel %vm99, %v46, 0
  %v203 = vsel %vm99, %v55, 0
  %v205 = vsel %vm99, %v52, 0
  %207 = vmatprep.subr.mxu0 %v68
  %208 = vmatpush1.msra.mxu0 %v67
  %209 = vmatprep.subr.mxu0 %v70
  %210 = vmatpush1.msra.mxu0 %v69
  %211 = vmatprep.subr.mxu0 %v72
  %212 = vmatpush1.msra.mxu0 %v71
  %213 = vmatprep.subr.mxu0 %v74
  %214 = vmatpush1.msra.mxu0 %v73
  %215 = vmatprep.subr.mxu0 %v76
  %216 = vmatpush1.msra.mxu0 %v75
  %217 = vmatprep.subr.mxu0 %v78
  %218 = vmatpush1.msra.mxu0 %v77
  %219 = vmatprep.subr.mxu0 %v80
  %220 = vmatpush1.msra.mxu0 %v79
  %221 = vmatprep.subr.mxu0 %v82
  %222 = vmatpush1.msra.mxu0 %v81
  %223 = vmatprep.subr.mxu0 0.0
  %224 = vmatpush1.msra.mxu0 0.0
  %225 = vmatprep.subr.mxu0 0.0
  %226 = vmatpush1.msra.mxu0 0.0
  %227 = vmatprep.subr.mxu0 0.0
  %228 = vmatpush1.msra.mxu0 0.0
  %229 = vmatprep.subr.mxu0 0.0
  %230 = vmatpush1.msra.mxu0 0.0
  %231 = vmatprep.subr.mxu0 0.0
  %232 = vmatpush1.msra.mxu0 0.0
  %233 = vmatprep.subr.mxu0 0.0
  %234 = vmatpush1.msra.mxu0 0.0
  %235 = vmatprep.subr.mxu0 0.0
  %236 = vmatpush1.msra.mxu0 0.0
  %237 = vmatprep.subr.mxu0 0.0
  %238 = vmatpush1.msra.mxu0 0.0
  %239 = vmatprep.subr.mxu0 0.0
  %240 = vmatpush1.msra.mxu0 0.0
  %241 = vmatprep.subr.mxu0 0.0
  %242 = vmatpush1.msra.mxu0 0.0
  %243 = vmatprep.subr.mxu0 0.0
  %244 = vmatpush1.msra.mxu0 0.0
  %245 = vmatprep.subr.mxu0 0.0
  %246 = vmatpush1.msra.mxu0 0.0
  %247 = vmatprep.subr.mxu0 0.0
  %248 = vmatpush1.msra.mxu0 0.0
  %249 = vmatprep.subr.mxu0 0.0
  %250 = vmatpush1.msra.mxu0 0.0
  %251 = vmatprep.subr.mxu0 0.0
  %252 = vmatpush1.msra.mxu0 0.0
  %253 = vmatprep.subr.mxu0 0.0
  %254 = vmatpush1.msra.mxu0 0.0
  %255 = vmatprep.subr.mxu0 0.0
  %256 = vmatpush1.msra.mxu0 0.0
  %257 = vmatprep.subr.mxu0 0.0
  %258 = vmatpush1.msra.mxu0 0.0
  %259 = vmatprep.subr.mxu0 0.0
  %260 = vmatpush1.msra.mxu0 0.0
  %261 = vmatprep.subr.mxu0 0.0
  %262 = vmatpush1.msra.mxu0 0.0
  %263 = vmatprep.subr.mxu0 0.0
  %264 = vmatpush1.msra.mxu0 0.0
  %265 = vmatprep.subr.mxu0 0.0
  %266 = vmatpush1.msra.mxu0 0.0
  %267 = vmatprep.subr.mxu0 0.0
  %268 = vmatpush1.msra.mxu0 0.0
  %269 = vmatprep.subr.mxu0 0.0
  %270 = vmatpush1.msra.mxu0 0.0
  %271 = vmatprep.mubr.f32.mxu0 0.0
  %272 = vmatmul.mubr.f32.gmra.mrb[0].mxu0 %v198
  %v273 = vpop.f32.mrb[0].mxu0
  %v274 = vadd.f32 %v175, %v273
  %v275 = vpop.f32.mrb[0].mxu0
  %v276 = vadd.f32 %v177, %v275
  %277 = vmatprep.mubr.f32.mxu0 0.0
  %278 = vmatmul.mubr.f32.gmra.mrb[0].mxu0 %v200
  %v279 = vpop.f32.mrb[0].mxu0
  %v280 = vadd.f32 %v181, %v279
  %v281 = vpop.f32.mrb[0].mxu0
  %v282 = vadd.f32 %v183, %v281
  %283 = vmatprep.mubr.f32.mxu0 0.0
  %284 = vmatmul.mubr.f32.gmra.mrb[0].mxu0 %v203
  %v285 = vpop.f32.mrb[0].mxu0
  %v286 = vadd.f32 %v187, %v285
  %v287 = vpop.f32.mrb[0].mxu0
  %v288 = vadd.f32 %v189, %v287
  %289 = vmatprep.mubr.f32.mxu0 0.0
  %290 = vmatmul.mubr.f32.gmra.mrb[0].mxu0 %v205
  %v291 = vpop.f32.mrb[0].mxu0
  %v292 = vadd.f32 %v193, %v291
  %v293 = vpop.f32.mrb[0].mxu0
  %v294 = vadd.f32 %v195, %v293
  %295 = vdwg.mxu0
  %v296 = vld [vmem:[%s3] sm:$0xff]
  %v297 = vld [vmem:[%s3 + $0x8] sm:$0xff]
  %v298 = vld [vmem:[%s3 + $0x10] sm:$0xff]
  %v299 = vld [vmem:[%s3 + $0x18] sm:$0xff]
  %v300 = vld [vmem:[%s3 + $0x20] sm:$0xff]
  %v301 = vld [vmem:[%s3 + $0x28] sm:$0xff]
  %v302 = vld [vmem:[%s3 + $0x30] sm:$0xff]
  %v303 = vld [vmem:[%s3 + $0x38] sm:$0xff]
  %v304 = vld [vmem:[%s3 + $0x40] sm:$0xff]
  %v305 = vld [vmem:[%s3 + $0x48] sm:$0xff]
  %v306 = vld [vmem:[%s3 + $0x50] sm:$0xff]
  %v307 = vld [vmem:[%s3 + $0x58] sm:$0xff]
  %v308 = vld [vmem:[%s3 + $0x60] sm:$0xff]
  %v309 = vld [vmem:[%s3 + $0x68] sm:$0xff]
  %v310 = vld [vmem:[%s3 + $0x70] sm:$0xff]
  %v311 = vld [vmem:[%s3 + $0x78] sm:$0xff]
  %v312 = vsel %vm99, %v59, 0
  %v315 = vsel %vm99, %v65, 0
  %v317 = vsel %vm99, %v63, 0
  %v320 = vsel %vm99, %v66, 0
  %322 = vmatprep.subr.mxu0 %v297
  %323 = vmatpush1.msra.mxu0 %v296
  %324 = vmatprep.subr.mxu0 %v299
  %325 = vmatpush1.msra.mxu0 %v298
  %326 = vmatprep.subr.mxu0 %v301
  %327 = vmatpush1.msra.mxu0 %v300
  %328 = vmatprep.subr.mxu0 %v303
  %329 = vmatpush1.msra.mxu0 %v302
  %330 = vmatprep.subr.mxu0 %v305
  %331 = vmatpush1.msra.mxu0 %v304
  %332 = vmatprep.subr.mxu0 %v307
  %333 = vmatpush1.msra.mxu0 %v306
  %334 = vmatprep.subr.mxu0 %v309
  %335 = vmatpush1.msra.mxu0 %v308
  %336 = vmatprep.subr.mxu0 %v311
  %337 = vmatpush1.msra.mxu0 %v310
  %338 = vmatprep.subr.mxu0 0.0
  %339 = vmatpush1.msra.mxu0 0.0
  %340 = vmatprep.subr.mxu0 0.0
  %341 = vmatpush1.msra.mxu0 0.0
  %342 = vmatprep.subr.mxu0 0.0
  %343 = vmatpush1.msra.mxu0 0.0
  %344 = vmatprep.subr.mxu0 0.0
  %345 = vmatpush1.msra.mxu0 0.0
  %346 = vmatprep.subr.mxu0 0.0
  %347 = vmatpush1.msra.mxu0 0.0
  %348 = vmatprep.subr.mxu0 0.0
  %349 = vmatpush1.msra.mxu0 0.0
  %350 = vmatprep.subr.mxu0 0.0
  %351 = vmatpush1.msra.mxu0 0.0
  %352 = vmatprep.subr.mxu0 0.0
  %353 = vmatpush1.msra.mxu0 0.0
  %354 = vmatprep.subr.mxu0 0.0
  %355 = vmatpush1.msra.mxu0 0.0
  %356 = vmatprep.subr.mxu0 0.0
  %357 = vmatpush1.msra.mxu0 0.0
  %358 = vmatprep.subr.mxu0 0.0
  %359 = vmatpush1.msra.mxu0 0.0
  %360 = vmatprep.subr.mxu0 0.0
  %361 = vmatpush1.msra.mxu0 0.0
  %362 = vmatprep.subr.mxu0 0.0
  %363 = vmatpush1.msra.mxu0 0.0
  %364 = vmatprep.subr.mxu0 0.0
  %365 = vmatpush1.msra.mxu0 0.0
  %366 = vmatprep.subr.mxu0 0.0
  %367 = vmatpush1.msra.mxu0 0.0
  %368 = vmatprep.subr.mxu0 0.0
  %369 = vmatpush1.msra.mxu0 0.0
  %370 = vmatprep.subr.mxu0 0.0
  %371 = vmatpush1.msra.mxu0 0.0
  %372 = vmatprep.subr.mxu0 0.0
  %373 = vmatpush1.msra.mxu0 0.0
  %374 = vmatprep.subr.mxu0 0.0
  %375 = vmatpush1.msra.mxu0 0.0
  %376 = vmatprep.subr.mxu0 0.0
  %377 = vmatpush1.msra.mxu0 0.0
  %378 = vmatprep.subr.mxu0 0.0
  %379 = vmatpush1.msra.mxu0 0.0
  %380 = vmatprep.subr.mxu0 0.0
  %381 = vmatpush1.msra.mxu0 0.0
  %382 = vmatprep.subr.mxu0 0.0
  %383 = vmatpush1.msra.mxu0 0.0
  %384 = vmatprep.subr.mxu0 0.0
  %385 = vmatpush1.msra.mxu0 0.0
  %386 = vmatprep.mubr.f32.mxu0 0.0
  %387 = vmatmul.mubr.f32.gmra.mrb[0].mxu0 %v312
  %v388 = vpop.f32.mrb[0].mxu0
  %v389 = vadd.f32 0.0, %v388
  %v390 = vpop.f32.mrb[0].mxu0
  %v391 = vadd.f32 0.0, %v390
  %392 = vmatprep.mubr.f32.mxu0 0.0
  %393 = vmatmul.mubr.f32.gmra.mrb[0].mxu0 %v315
  %v394 = vpop.f32.mrb[0].mxu0
  %v395 = vadd.f32 0.0, %v394
  %v396 = vpop.f32.mrb[0].mxu0
  %v397 = vadd.f32 0.0, %v396
  %398 = vmatprep.mubr.f32.mxu0 0.0
  %399 = vmatmul.mubr.f32.gmra.mrb[0].mxu0 %v317
  %v400 = vpop.f32.mrb[0].mxu0
  %v401 = vadd.f32 0.0, %v400
  %v402 = vpop.f32.mrb[0].mxu0
  %v403 = vadd.f32 0.0, %v402
  %404 = vmatprep.mubr.f32.mxu0 0.0
  %405 = vmatmul.mubr.f32.gmra.mrb[0].mxu0 %v320
  %v406 = vpop.f32.mrb[0].mxu0
  %v407 = vadd.f32 0.0, %v406
  %v408 = vpop.f32.mrb[0].mxu0
  %v409 = vadd.f32 0.0, %v408
  %410 = vdwg.mxu0
  %v411 = vadd.f32 %v274, %v389
  %v412 = vadd.f32 %v276, %v391
  %v413 = vadd.f32 %v280, %v395
  %v414 = vadd.f32 %v282, %v397
  %v415 = vadd.f32 %v286, %v401
  %v416 = vadd.f32 %v288, %v403
  %v417 = vadd.f32 %v292, %v407
  %v418 = vadd.f32 %v294, %v409
  %v419 = vld [vmem:[%s4] sm:$0x3]
  %v421 = vlaneseq
  %v422 = vshrl.u32 %v421, 7
  %v423 = vsub.s32 0, %v422
  %v424 = vrot.slane %v419, %v423
  %v425 = vlaneseq
  %v426 = vshrl.u32 %v425, 7
  %v427 = vsub.s32 1, %v426
  %v428 = vrot.slane %v419, %v427
  %v431 = vadd.f32 %v411, %v424
  %v432 = vadd.f32 %v412, %v428
  %v433 = vadd.f32 %v413, %v424
  %v434 = vadd.f32 %v414, %v428
  %v435 = vadd.f32 %v415, %v424
  %v436 = vadd.f32 %v416, %v428
  %v437 = vadd.f32 %v417, %v424
  %v438 = vadd.f32 %v418, %v428
  %v439 = vlaneseq
  %v440 = vshrl.u32 %v439, 7
  %v441 = vadd.s32 %v440, 8
  %v442 = vadd.s32 %v440, 16
  %v443 = vadd.s32 %v440, 24
  %v444 = vadd.s32 %v440, 32
  %v445 = vadd.s32 %v440, 40
  %v446 = vadd.s32 %v440, 48
  %v447 = vadd.s32 %v440, 56
  %v448 = vadd.s32 %v440, 64
  %v449 = vadd.s32 %v440, 72
  %v450 = vadd.s32 %v440, 80
  %v451 = vadd.s32 %v440, 88
  %v452 = vadd.s32 %v440, 96
  %v453 = vadd.s32 %v440, 104
  %v454 = vadd.s32 %v440, 112
  %v455 = vadd.s32 %v440, 120
  %vm456 = vcmp.lt.s32.totalorder %v440, 0
  %v457 = vsub.s32 0, %v440
  %v458 = vsel %vm456, %v457, %v440
  %v459 = vshrl.u32 %v458, 3
  %v460 = vand.u32 %v458, 7
  %v461 = vsub.s32 0, %v460
  %v462 = vsel %vm456, %v461, %v460
  %vm463 = vcmp.lt.s32.totalorder %v441, 0
  %v464 = vsub.s32 0, %v441
  %v465 = vsel %vm463, %v464, %v441
  %v466 = vshrl.u32 %v465, 3
  %v467 = vand.u32 %v465, 7
  %v468 = vsub.s32 0, %v467
  %v469 = vsel %vm463, %v468, %v467
  %vm470 = vcmp.lt.s32.totalorder %v442, 0
  %v471 = vsub.s32 0, %v442
  %v472 = vsel %vm470, %v471, %v442
  %v473 = vshrl.u32 %v472, 3
  %v474 = vand.u32 %v472, 7
  %v475 = vsub.s32 0, %v474
  %v476 = vsel %vm470, %v475, %v474
  %vm477 = vcmp.lt.s32.totalorder %v443, 0
  %v478 = vsub.s32 0, %v443
  %v479 = vsel %vm477, %v478, %v443
  %v480 = vshrl.u32 %v479, 3
  %v481 = vand.u32 %v479, 7
  %v482 = vsub.s32 0, %v481
  %v483 = vsel %vm477, %v482, %v481
  %vm484 = vcmp.lt.s32.totalorder %v444, 0
  %v485 = vsub.s32 0, %v444
  %v486 = vsel %vm484, %v485, %v444
  %v487 = vshrl.u32 %v486, 3
  %v488 = vand.u32 %v486, 7
  %v489 = vsub.s32 0, %v488
  %v490 = vsel %vm484, %v489, %v488
  %vm491 = vcmp.lt.s32.totalorder %v445, 0
  %v492 = vsub.s32 0, %v445
  %v493 = vsel %vm491, %v492, %v445
  %v494 = vshrl.u32 %v493, 3
  %v495 = vand.u32 %v493, 7
  %v496 = vsub.s32 0, %v495
  %v497 = vsel %vm491, %v496, %v495
  %vm498 = vcmp.lt.s32.totalorder %v446, 0
  %v499 = vsub.s32 0, %v446
  %v500 = vsel %vm498, %v499, %v446
  %v501 = vshrl.u32 %v500, 3
  %v502 = vand.u32 %v500, 7
  %v503 = vsub.s32 0, %v502
  %v504 = vsel %vm498, %v503, %v502
  %vm505 = vcmp.lt.s32.totalorder %v447, 0
  %v506 = vsub.s32 0, %v447
  %v507 = vsel %vm505, %v506, %v447
  %v508 = vshrl.u32 %v507, 3
  %v509 = vand.u32 %v507, 7
  %v510 = vsub.s32 0, %v509
  %v511 = vsel %vm505, %v510, %v509
  %vm512 = vcmp.lt.s32.totalorder %v448, 0
  %v513 = vsub.s32 0, %v448
  %v514 = vsel %vm512, %v513, %v448
  %v515 = vshrl.u32 %v514, 3
  %v516 = vand.u32 %v514, 7
  %v517 = vsub.s32 0, %v516
  %v518 = vsel %vm512, %v517, %v516
  %vm519 = vcmp.lt.s32.totalorder %v449, 0
  %v520 = vsub.s32 0, %v449
  %v521 = vsel %vm519, %v520, %v449
  %v522 = vshrl.u32 %v521, 3
  %v523 = vand.u32 %v521, 7
  %v524 = vsub.s32 0, %v523
  %v525 = vsel %vm519, %v524, %v523
  %vm526 = vcmp.lt.s32.totalorder %v450, 0
  %v527 = vsub.s32 0, %v450
  %v528 = vsel %vm526, %v527, %v450
  %v529 = vshrl.u32 %v528, 3
  %v530 = vand.u32 %v528, 7
  %v531 = vsub.s32 0, %v530
  %v532 = vsel %vm526, %v531, %v530
  %vm533 = vcmp.lt.s32.totalorder %v451, 0
  %v534 = vsub.s32 0, %v451
  %v535 = vsel %vm533, %v534, %v451
  %v536 = vshrl.u32 %v535, 3
  %v537 = vand.u32 %v535, 7
  %v538 = vsub.s32 0, %v537
  %v539 = vsel %vm533, %v538, %v537
  %vm540 = vcmp.lt.s32.totalorder %v452, 0
  %v541 = vsub.s32 0, %v452
  %v542 = vsel %vm540, %v541, %v452
  %v543 = vshrl.u32 %v542, 3
  %v544 = vand.u32 %v542, 7
  %v545 = vsub.s32 0, %v544
  %v546 = vsel %vm540, %v545, %v544
  %vm547 = vcmp.lt.s32.totalorder %v453, 0
  %v548 = vsub.s32 0, %v453
  %v549 = vsel %vm547, %v548, %v453
  %v550 = vshrl.u32 %v549, 3
  %v551 = vand.u32 %v549, 7
  %v552 = vsub.s32 0, %v551
  %v553 = vsel %vm547, %v552, %v551
  %vm554 = vcmp.lt.s32.totalorder %v454, 0
  %v555 = vsub.s32 0, %v454
  %v556 = vsel %vm554, %v555, %v454
  %v557 = vshrl.u32 %v556, 3
  %v558 = vand.u32 %v556, 7
  %v559 = vsub.s32 0, %v558
  %v560 = vsel %vm554, %v559, %v558
  %vm561 = vcmp.lt.s32.totalorder %v455, 0
  %v562 = vsub.s32 0, %v455
  %v563 = vsel %vm561, %v562, %v455
  %v564 = vshrl.u32 %v563, 3
  %v565 = vand.u32 %v563, 7
  %v566 = vsub.s32 0, %v565
  %v567 = vsel %vm561, %v566, %v565
  %vm568 = vcmp.ne.s32.totalorder %v462, 0
  %vm569 = vcmp.ne.s32.totalorder %v469, 0
  %vm570 = vcmp.ne.s32.totalorder %v476, 0
  %vm571 = vcmp.ne.s32.totalorder %v483, 0
  %vm572 = vcmp.ne.s32.totalorder %v490, 0
  %vm573 = vcmp.ne.s32.totalorder %v497, 0
  %vm574 = vcmp.ne.s32.totalorder %v504, 0
  %vm575 = vcmp.ne.s32.totalorder %v511, 0
  %vm576 = vcmp.ne.s32.totalorder %v518, 0
  %vm577 = vcmp.ne.s32.totalorder %v525, 0
  %vm578 = vcmp.ne.s32.totalorder %v532, 0
  %vm579 = vcmp.ne.s32.totalorder %v539, 0
  %vm580 = vcmp.ne.s32.totalorder %v546, 0
  %vm581 = vcmp.ne.s32.totalorder %v553, 0
  %vm582 = vcmp.ne.s32.totalorder %v560, 0
  %vm583 = vcmp.ne.s32.totalorder %v567, 0
  %vm584 = vcmp.lt.s32.totalorder %v462, 0
  %vm585 = vcmp.lt.s32.totalorder %v469, 0
  %vm586 = vcmp.lt.s32.totalorder %v476, 0
  %vm587 = vcmp.lt.s32.totalorder %v483, 0
  %vm588 = vcmp.lt.s32.totalorder %v490, 0
  %vm589 = vcmp.lt.s32.totalorder %v497, 0
  %vm590 = vcmp.lt.s32.totalorder %v504, 0
  %vm591 = vcmp.lt.s32.totalorder %v511, 0
  %vm592 = vcmp.lt.s32.totalorder %v518, 0
  %vm593 = vcmp.lt.s32.totalorder %v525, 0
  %vm594 = vcmp.lt.s32.totalorder %v532, 0
  %vm595 = vcmp.lt.s32.totalorder %v539, 0
  %vm596 = vcmp.lt.s32.totalorder %v546, 0
  %vm597 = vcmp.lt.s32.totalorder %v553, 0
  %vm598 = vcmp.lt.s32.totalorder %v560, 0
  %vm599 = vcmp.lt.s32.totalorder %v567, 0
  %vm600 = vmand %vm584, %vm568
  %vm601 = vmand %vm585, %vm569
  %vm602 = vmand %vm586, %vm570
  %vm603 = vmand %vm587, %vm571
  %vm604 = vmand %vm588, %vm572
  %vm605 = vmand %vm589, %vm573
  %vm606 = vmand %vm590, %vm574
  %vm607 = vmand %vm591, %vm575
  %vm608 = vmand %vm592, %vm576
  %vm609 = vmand %vm593, %vm577
  %vm610 = vmand %vm594, %vm578
  %vm611 = vmand %vm595, %vm579
  %vm612 = vmand %vm596, %vm580
  %vm613 = vmand %vm597, %vm581
  %vm614 = vmand %vm598, %vm582
  %vm615 = vmand %vm599, %vm583
  %v616 = vadd.s32 %v462, 8
  %v617 = vadd.s32 %v469, 8
  %v618 = vadd.s32 %v476, 8
  %v619 = vadd.s32 %v483, 8
  %v620 = vadd.s32 %v490, 8
  %v621 = vadd.s32 %v497, 8
  %v622 = vadd.s32 %v504, 8
  %v623 = vadd.s32 %v511, 8
  %v624 = vadd.s32 %v518, 8
  %v625 = vadd.s32 %v525, 8
  %v626 = vadd.s32 %v532, 8
  %v627 = vadd.s32 %v539, 8
  %v628 = vadd.s32 %v546, 8
  %v629 = vadd.s32 %v553, 8
  %v630 = vadd.s32 %v560, 8
  %v631 = vadd.s32 %v567, 8
  %v632 = vsel %vm600, %v616, %v462
  %v633 = vsel %vm601, %v617, %v469
  %v634 = vsel %vm602, %v618, %v476
  %v635 = vsel %vm603, %v619, %v483
  %v636 = vsel %vm604, %v620, %v490
  %v637 = vsel %vm605, %v621, %v497
  %v638 = vsel %vm606, %v622, %v504
  %v639 = vsel %vm607, %v623, %v511
  %v640 = vsel %vm608, %v624, %v518
  %v641 = vsel %vm609, %v625, %v525
  %v642 = vsel %vm610, %v626, %v532
  %v643 = vsel %vm611, %v627, %v539
  %v644 = vsel %vm612, %v628, %v546
  %v645 = vsel %vm613, %v629, %v553
  %v646 = vsel %vm614, %v630, %v560
  %v647 = vsel %vm615, %v631, %v567
  %v648 = vlaneseq
  %v649 = vand.u32 %v648, 127
  %vm650 = vcmp.eq.s32.totalorder %v632, %v649
  %vm651 = vcmp.eq.s32.totalorder %v633, %v649
  %vm652 = vcmp.eq.s32.totalorder %v634, %v649
  %vm653 = vcmp.eq.s32.totalorder %v635, %v649
  %vm654 = vcmp.eq.s32.totalorder %v636, %v649
  %vm655 = vcmp.eq.s32.totalorder %v637, %v649
  %vm656 = vcmp.eq.s32.totalorder %v638, %v649
  %vm657 = vcmp.eq.s32.totalorder %v639, %v649
  %vm658 = vcmp.eq.s32.totalorder %v640, %v649
  %vm659 = vcmp.eq.s32.totalorder %v641, %v649
  %vm660 = vcmp.eq.s32.totalorder %v642, %v649
  %vm661 = vcmp.eq.s32.totalorder %v643, %v649
  %vm662 = vcmp.eq.s32.totalorder %v644, %v649
  %vm663 = vcmp.eq.s32.totalorder %v645, %v649
  %vm664 = vcmp.eq.s32.totalorder %v646, %v649
  %vm665 = vcmp.eq.s32.totalorder %v647, %v649
  %v666 = vsel %vm650, 1, 0
  %v667 = vsel %vm651, 1, 0
  %v668 = vsel %vm652, 1, 0
  %v669 = vsel %vm653, 1, 0
  %v670 = vsel %vm654, 1, 0
  %v671 = vsel %vm655, 1, 0
  %v672 = vsel %vm656, 1, 0
  %v673 = vsel %vm657, 1, 0
  %v674 = vsel %vm658, 1, 0
  %v675 = vsel %vm659, 1, 0
  %v676 = vsel %vm660, 1, 0
  %v677 = vsel %vm661, 1, 0
  %v678 = vsel %vm662, 1, 0
  %v679 = vsel %vm663, 1, 0
  %v680 = vsel %vm664, 1, 0
  %v681 = vsel %vm665, 1, 0
  %v682 = vcvt.s32.f32 %v666
  %v683 = vcvt.s32.f32 %v667
  %v684 = vcvt.s32.f32 %v668
  %v685 = vcvt.s32.f32 %v669
  %v686 = vcvt.s32.f32 %v670
  %v687 = vcvt.s32.f32 %v671
  %v688 = vcvt.s32.f32 %v672
  %v689 = vcvt.s32.f32 %v673
  %v690 = vcvt.s32.f32 %v674
  %v691 = vcvt.s32.f32 %v675
  %v692 = vcvt.s32.f32 %v676
  %v693 = vcvt.s32.f32 %v677
  %v694 = vcvt.s32.f32 %v678
  %v695 = vcvt.s32.f32 %v679
  %v696 = vcvt.s32.f32 %v680
  %v697 = vcvt.s32.f32 %v681
  %vm698 = vcmp.lt.s32.totalorder %v649, 0
  %v699 = vsub.s32 0, %v649
  %v700 = vsel %vm698, %v699, %v649
  %v701 = vshrl.u32 %v700, 3
  %v702 = vand.u32 %v700, 7
  %v703 = vsub.s32 0, %v702
  %v704 = vsel %vm698, %v703, %v702
  %vm705 = vcmp.ne.s32.totalorder %v704, 0
  %vm706 = vcmp.lt.s32.totalorder %v704, 0
  %vm707 = vmand %vm706, %vm705
  %v708 = vadd.s32 %v704, 8
  %v709 = vsel %vm707, %v708, %v704
  %vm710 = vcmp.eq.s32.totalorder %v709, %v440
  %v711 = vsel %vm710, 1, 0
  %v712 = vcvt.s32.f32 %v711
  %vm713 = vcmp.lt.s32.totalorder %v649, 4
  %v714 = vsel %vm713, 1, 0
  %v715 = vcvt.s32.f32 %v714
  %v716 = vmul.f32 %v431, %v431
  %v717 = vmul.f32 %v433, %v433
  %v718 = vmul.f32 %v435, %v435
  %v719 = vmul.f32 %v437, %v437
  %v720 = vadd.f32 %v431, %v433
  %v721 = vrot.slane %v720, 4
  %v722 = vadd.f32 %v720, %v721
  %v723 = vrot.slane %v722, 2
  %v724 = vadd.f32 %v722, %v723
  %v725 = vrot.slane %v724, 1
  %v726 = vadd.f32 %v724, %v725
  %v727 = vadd.f32 %v435, %v437
  %v728 = vrot.slane %v727, 4
  %v729 = vadd.f32 %v727, %v728
  %v730 = vrot.slane %v729, 2
  %v731 = vadd.f32 %v729, %v730
  %v732 = vrot.slane %v731, 1
  %v733 = vadd.f32 %v731, %v732
  %v734 = vadd.f32 %v716, %v717
  %v735 = vrot.slane %v734, 4
  %v736 = vadd.f32 %v734, %v735
  %v737 = vrot.slane %v736, 2
  %v738 = vadd.f32 %v736, %v737
  %v739 = vrot.slane %v738, 1
  %v740 = vadd.f32 %v738, %v739
  %v741 = vadd.f32 %v718, %v719
  %v742 = vrot.slane %v741, 4
  %v743 = vadd.f32 %v741, %v742
  %v744 = vrot.slane %v743, 2
  %v745 = vadd.f32 %v743, %v744
  %v746 = vrot.slane %v745, 1
  %v747 = vadd.f32 %v745, %v746
  %v748 = vsel %vm43, %v726, %v733
  %vm749 = vcmask 1041408
  %v750 = vsel %vm749, %v748, %v740
  %vm751 = vcmask 1042432
  %v752 = vsel %vm751, %v750, %v747
  %753 = vmatprep.subr.mxu0 0.0
  %754 = vmatpush1.msra.mxu0 %v682
  %755 = vmatprep.subr.mxu0 0.0
  %756 = vmatpush1.msra.mxu0 %v683
  %757 = vmatprep.subr.mxu0 0.0
  %758 = vmatpush1.msra.mxu0 %v684
  %759 = vmatprep.subr.mxu0 0.0
  %760 = vmatpush1.msra.mxu0 %v685
  %761 = vmatprep.subr.mxu0 0.0
  %762 = vmatpush1.msra.mxu0 %v686
  %763 = vmatprep.subr.mxu0 0.0
  %764 = vmatpush1.msra.mxu0 %v687
  %765 = vmatprep.subr.mxu0 0.0
  %766 = vmatpush1.msra.mxu0 %v688
  %767 = vmatprep.subr.mxu0 0.0
  %768 = vmatpush1.msra.mxu0 %v689
  %769 = vmatprep.subr.mxu0 0.0
  %770 = vmatpush1.msra.mxu0 %v690
  %771 = vmatprep.subr.mxu0 0.0
  %772 = vmatpush1.msra.mxu0 %v691
  %773 = vmatprep.subr.mxu0 0.0
  %774 = vmatpush1.msra.mxu0 %v692
  %775 = vmatprep.subr.mxu0 0.0
  %776 = vmatpush1.msra.mxu0 %v693
  %777 = vmatprep.subr.mxu0 0.0
  %778 = vmatpush1.msra.mxu0 %v694
  %779 = vmatprep.subr.mxu0 0.0
  %780 = vmatpush1.msra.mxu0 %v695
  %781 = vmatprep.subr.mxu0 0.0
  %782 = vmatpush1.msra.mxu0 %v696
  %783 = vmatprep.subr.mxu0 0.0
  %784 = vmatpush1.msra.mxu0 %v697
  %785 = vmatprep.subr.mxu0 0.0
  %786 = vmatpush1.msra.mxu0 0.0
  %787 = vmatprep.subr.mxu0 0.0
  %788 = vmatpush1.msra.mxu0 0.0
  %789 = vmatprep.subr.mxu0 0.0
  %790 = vmatpush1.msra.mxu0 0.0
  %791 = vmatprep.subr.mxu0 0.0
  %792 = vmatpush1.msra.mxu0 0.0
  %793 = vmatprep.subr.mxu0 0.0
  %794 = vmatpush1.msra.mxu0 0.0
  %795 = vmatprep.subr.mxu0 0.0
  %796 = vmatpush1.msra.mxu0 0.0
  %797 = vmatprep.subr.mxu0 0.0
  %798 = vmatpush1.msra.mxu0 0.0
  %799 = vmatprep.subr.mxu0 0.0
  %800 = vmatpush1.msra.mxu0 0.0
  %801 = vmatprep.subr.mxu0 0.0
  %802 = vmatpush1.msra.mxu0 0.0
  %803 = vmatprep.subr.mxu0 0.0
  %804 = vmatpush1.msra.mxu0 0.0
  %805 = vmatprep.subr.mxu0 0.0
  %806 = vmatpush1.msra.mxu0 0.0
  %807 = vmatprep.subr.mxu0 0.0
  %808 = vmatpush1.msra.mxu0 0.0
  %809 = vmatprep.subr.mxu0 0.0
  %810 = vmatpush1.msra.mxu0 0.0
  %811 = vmatprep.subr.mxu0 0.0
  %812 = vmatpush1.msra.mxu0 0.0
  %813 = vmatprep.subr.mxu0 0.0
  %814 = vmatpush1.msra.mxu0 0.0
  %815 = vmatprep.subr.mxu0 0.0
  %816 = vmatpush1.msra.mxu0 0.0
  %817 = vmatprep.mubr.f32.mxu0 0.0
  %818 = vmatmul.mubr.f32.gmra.mrb[0].mxu0 %v752
  %v819 = vpop.f32.mrb[0].mxu0
  %v820 = vadd.f32 0.0, %v819
  %v821 = vpop.f32.mrb[0].mxu0
  %822 = vdwg.mxu0
  %v823 = vmul.f32 %v820, 0.00390625
  %v824 = vmul.f32 %v823, %v823
  %v826 = vrot.slane %v824, 6
  %v828 = vsub.f32 %v823, %v826
  %v829 = vmax.f32 %v828, 0.0
  %v830 = vld [vmem:[%s5] sm:$0x1]
  %v831 = vadd.f32 %v829, 1e-05
  %v832 = vrsqrt.pop %v831
  %v834 = vlaneseq
  %v835 = vshrl.u32 %v834, 7
  %v836 = vsub.s32 0, %v835
  %v837 = vrot.slane %v830, %v836
  %v839 = vmul.f32 %v837, %v832
  %v840 = vmul.f32 %v715, %v839
  %v841 = vsub.f32 1.0, %v715
  %v842 = vadd.f32 %v840, %v841
  %v843 = vld [vmem:[%s6] sm:$0x1]
  %v845 = vrot.slane %v839, 2
  %v847 = vmul.f32 %v823, %v845
  %v849 = vlaneseq
  %v850 = vshrl.u32 %v849, 7
  %v851 = vsub.s32 0, %v850
  %v852 = vrot.slane %v843, %v851
  %v854 = vsub.f32 %v852, %v847
  %v855 = vmul.f32 %v715, %v854
  %v857 = vrot.slane %v842, 2
  %v860 = vrot.slane %v855, 6
  %v862 = vsel %vm749, %v857, %v860
  %vm863 = vcmask 64512
  %v865 = vsel %vm863, %v862, 0
  %867 = vmatprep.subr.mxu0 0.0
  %868 = vmatpush1.msra.mxu0 %v712
  %869 = vmatprep.subr.mxu0 0.0
  %870 = vmatpush1.msra.mxu0 0.0
  %871 = vmatprep.subr.mxu0 0.0
  %872 = vmatpush1.msra.mxu0 0.0
  %873 = vmatprep.subr.mxu0 0.0
  %874 = vmatpush1.msra.mxu0 0.0
  %875 = vmatprep.subr.mxu0 0.0
  %876 = vmatpush1.msra.mxu0 0.0
  %877 = vmatprep.subr.mxu0 0.0
  %878 = vmatpush1.msra.mxu0 0.0
  %879 = vmatprep.subr.mxu0 0.0
  %880 = vmatpush1.msra.mxu0 0.0
  %881 = vmatprep.subr.mxu0 0.0
  %882 = vmatpush1.msra.mxu0 0.0
  %883 = vmatprep.subr.mxu0 0.0
  %884 = vmatpush1.msra.mxu0 0.0
  %885 = vmatprep.subr.mxu0 0.0
  %886 = vmatpush1.msra.mxu0 0.0
  %887 = vmatprep.subr.mxu0 0.0
  %888 = vmatpush1.msra.mxu0 0.0
  %889 = vmatprep.subr.mxu0 0.0
  %890 = vmatpush1.msra.mxu0 0.0
  %891 = vmatprep.subr.mxu0 0.0
  %892 = vmatpush1.msra.mxu0 0.0
  %893 = vmatprep.subr.mxu0 0.0
  %894 = vmatpush1.msra.mxu0 0.0
  %895 = vmatprep.subr.mxu0 0.0
  %896 = vmatpush1.msra.mxu0 0.0
  %897 = vmatprep.subr.mxu0 0.0
  %898 = vmatpush1.msra.mxu0 0.0
  %899 = vmatprep.subr.mxu0 0.0
  %900 = vmatpush1.msra.mxu0 0.0
  %901 = vmatprep.subr.mxu0 0.0
  %902 = vmatpush1.msra.mxu0 0.0
  %903 = vmatprep.subr.mxu0 0.0
  %904 = vmatpush1.msra.mxu0 0.0
  %905 = vmatprep.subr.mxu0 0.0
  %906 = vmatpush1.msra.mxu0 0.0
  %907 = vmatprep.subr.mxu0 0.0
  %908 = vmatpush1.msra.mxu0 0.0
  %909 = vmatprep.subr.mxu0 0.0
  %910 = vmatpush1.msra.mxu0 0.0
  %911 = vmatprep.subr.mxu0 0.0
  %912 = vmatpush1.msra.mxu0 0.0
  %913 = vmatprep.subr.mxu0 0.0
  %914 = vmatpush1.msra.mxu0 0.0
  %915 = vmatprep.subr.mxu0 0.0
  %916 = vmatpush1.msra.mxu0 0.0
  %917 = vmatprep.subr.mxu0 0.0
  %918 = vmatpush1.msra.mxu0 0.0
  %919 = vmatprep.subr.mxu0 0.0
  %920 = vmatpush1.msra.mxu0 0.0
  %921 = vmatprep.subr.mxu0 0.0
  %922 = vmatpush1.msra.mxu0 0.0
  %923 = vmatprep.subr.mxu0 0.0
  %924 = vmatpush1.msra.mxu0 0.0
  %925 = vmatprep.subr.mxu0 0.0
  %926 = vmatpush1.msra.mxu0 0.0
  %927 = vmatprep.subr.mxu0 0.0
  %928 = vmatpush1.msra.mxu0 0.0
  %929 = vmatprep.subr.mxu0 0.0
  %930 = vmatpush1.msra.mxu0 0.0
  %931 = vmatprep.mubr.f32.mxu0 0.0
  %932 = vmatmul.mubr.f32.gmra.mrb[0].mxu0 %v865
  %v933 = vpop.f32.mrb[0].mxu0
  %v934 = vadd.f32 0.0, %v933
  %v935 = vpop.f32.mrb[0].mxu0
  %936 = vdwg.mxu0
  %v937 = vlaneseq
  %v938 = vshrl.u32 %v937, 7
  %v939 = vsub.s32 0, %v938
  %v940 = vrot.slane %v934, %v939
  %v941 = vmul.f32 %v431, %v940
  %v942 = vmul.f32 %v433, %v940
  %v943 = vlaneseq
  %v944 = vshrl.u32 %v943, 7
  %v945 = vsub.s32 2, %v944
  %v946 = vrot.slane %v934, %v945
  %v947 = vadd.f32 %v941, %v946
  %v948 = vadd.f32 %v942, %v946
  %v949 = vlaneseq
  %v950 = vshrl.u32 %v949, 7
  %v951 = vsub.s32 1, %v950
  %v952 = vrot.slane %v934, %v951
  %v953 = vmul.f32 %v435, %v952
  %v954 = vmul.f32 %v437, %v952
  %v955 = vlaneseq
  %v956 = vshrl.u32 %v955, 7
  %v957 = vsub.s32 3, %v956
  %v958 = vrot.slane %v934, %v957
  %v959 = vadd.f32 %v953, %v958
  %v960 = vadd.f32 %v954, %v958
  %v961 = vmul.f32 %v947, 0.5
  %v962 = vmul.f32 %v948, 0.5
  %v963 = vmul.f32 %v959, 0.5
  %v964 = vmul.f32 %v960, 0.5
  %v965 = vmul.f32 %v947, 0.044715
  %v966 = vmul.f32 %v948, 0.044715
  %v967 = vmul.f32 %v959, 0.044715
  %v968 = vmul.f32 %v960, 0.044715
  %v969 = vmul.f32 %v965, %v947
  %v970 = vmul.f32 %v966, %v948
  %v971 = vmul.f32 %v967, %v959
  %v972 = vmul.f32 %v968, %v960
  %v973 = vmul.f32 %v969, %v947
  %v974 = vmul.f32 %v970, %v948
  %v975 = vmul.f32 %v971, %v959
  %v976 = vmul.f32 %v972, %v960
  %v977 = vadd.f32 %v947, %v973
  %v978 = vadd.f32 %v948, %v974
  %v979 = vadd.f32 %v959, %v975
  %v980 = vadd.f32 %v960, %v976
  %v981 = vmul.f32 %v977, 0.7978846
  %v982 = vmul.f32 %v978, 0.7978846
  %v983 = vmul.f32 %v979, 0.7978846
  %v984 = vmul.f32 %v980, 0.7978846
  %v985 = vtanh.pop %v981
  %v986 = vtanh.pop %v982
  %v987 = vtanh.pop %v983
  %v988 = vtanh.pop %v984
  %v989 = vadd.f32 %v985, 1.0
  %v990 = vadd.f32 %v986, 1.0
  %v991 = vadd.f32 %v987, 1.0
  %v992 = vadd.f32 %v988, 1.0
  %v993 = vmul.f32 %v961, %v989
  %v994 = vmul.f32 %v962, %v990
  %v995 = vmul.f32 %v963, %v991
  %v996 = vmul.f32 %v964, %v992
  %vm997 = vcmp.ge.f32.partialorder %v947, 0.0
  %vm998 = vcmp.ge.f32.partialorder %v948, 0.0
  %vm999 = vcmp.ge.f32.partialorder %v959, 0.0
  %vm1000 = vcmp.ge.f32.partialorder %v960, 0.0
  %v1001 = vmul.f32 %v947, 0.2
  %v1002 = vmul.f32 %v948, 0.2
  %v1003 = vmul.f32 %v959, 0.2
  %v1004 = vmul.f32 %v960, 0.2
  %v1005 = vsel %vm997, %v947, %v1001
  %v1006 = vsel %vm998, %v948, %v1002
  %v1007 = vsel %vm999, %v959, %v1003
  %v1008 = vsel %vm1000, %v960, %v1004
  %v1009 = vmul.f32 %v1005, 0.5267
  %v1010 = vmul.f32 %v1006, 0.5267
  %v1011 = vmul.f32 %v1007, 0.5267
  %v1012 = vmul.f32 %v1008, 0.5267
  %v1013 = vmul.f32 %v993, 0.4733
  %v1014 = vmul.f32 %v994, 0.4733
  %v1015 = vmul.f32 %v995, 0.4733
  %v1016 = vmul.f32 %v996, 0.4733
  %v1017 = vmul.f32 %v993, 0.5497
  %v1018 = vmul.f32 %v994, 0.5497
  %v1019 = vmul.f32 %v995, 0.5497
  %v1020 = vmul.f32 %v996, 0.5497
  %v1021 = vadd.f32 %v1009, %v1013
  %v1022 = vadd.f32 %v1010, %v1014
  %v1023 = vadd.f32 %v1011, %v1015
  %v1024 = vadd.f32 %v1012, %v1016
  %vm1025 = vcmp.ge.f32.partialorder %v1021, 0.0
  %vm1026 = vcmp.ge.f32.partialorder %v1022, 0.0
  %vm1027 = vcmp.ge.f32.partialorder %v1023, 0.0
  %vm1028 = vcmp.ge.f32.partialorder %v1024, 0.0
  %v1029 = vmul.f32 %v1021, 0.2
  %v1030 = vmul.f32 %v1022, 0.2
  %v1031 = vmul.f32 %v1023, 0.2
  %v1032 = vmul.f32 %v1024, 0.2
  %v1033 = vsel %vm1025, %v1021, %v1029
  %v1034 = vsel %vm1026, %v1022, %v1030
  %v1035 = vsel %vm1027, %v1023, %v1031
  %v1036 = vsel %vm1028, %v1024, %v1032
  %v1037 = vmul.f32 %v1033, 0.4591
  %v1038 = vmul.f32 %v1034, 0.4591
  %v1039 = vmul.f32 %v1035, 0.4591
  %v1040 = vmul.f32 %v1036, 0.4591
  %v1041 = vadd.f32 %v1037, %v1017
  %v1042 = vadd.f32 %v1038, %v1018
  %v1043 = vadd.f32 %v1039, %v1019
  %v1044 = vadd.f32 %v1040, %v1020
  %v1047 = vrot.slane %v1041, 7
  %v1048 = vrot.slane %v1042, 7
  %v1049 = vsel %vm43, %v1047, %v1048
  %v1054 = vrot.slane %v1043, 7
  %v1055 = vrot.slane %v1044, 7
  %v1056 = vsel %vm43, %v1054, %v1055
  %v1059 = vsel %vm43, 0.0, %v1047
  %v1060 = vsel %vm43, 0.0, %v1054
  %v1061 = vrot.slane %v1041, 1
  %v1062 = vrot.slane %v1042, 1
  %v1063 = vsel %vm56, %v1061, %v1062
  %v1066 = vrot.slane %v1043, 1
  %v1067 = vrot.slane %v1044, 1
  %v1068 = vsel %vm56, %v1066, %v1067
  %v1071 = vsel %vm56, %v1062, 0.0
  %v1072 = vsel %vm56, %v1067, 0.0
  %v1073 = vld [vmem:[%s7] sm:$0xff]
  %v1074 = vld [vmem:[%s7 + $0x8] sm:$0xff]
  %v1075 = vld [vmem:[%s7 + $0x10] sm:$0xff]
  %v1076 = vld [vmem:[%s7 + $0x18] sm:$0xff]
  %v1077 = vld [vmem:[%s7 + $0x20] sm:$0xff]
  %v1078 = vld [vmem:[%s7 + $0x28] sm:$0xff]
  %v1079 = vld [vmem:[%s7 + $0x30] sm:$0xff]
  %v1080 = vld [vmem:[%s7 + $0x38] sm:$0xff]
  %v1081 = vld [vmem:[%s7 + $0x40] sm:$0xff]
  %v1082 = vld [vmem:[%s7 + $0x48] sm:$0xff]
  %v1083 = vld [vmem:[%s7 + $0x50] sm:$0xff]
  %v1084 = vld [vmem:[%s7 + $0x58] sm:$0xff]
  %v1085 = vld [vmem:[%s7 + $0x60] sm:$0xff]
  %v1086 = vld [vmem:[%s7 + $0x68] sm:$0xff]
  %v1087 = vld [vmem:[%s7 + $0x70] sm:$0xff]
  %v1088 = vld [vmem:[%s7 + $0x78] sm:$0xff]
  %v1089 = vld [vmem:[%s7 + $0x80] sm:$0xff]
  %v1090 = vld [vmem:[%s7 + $0x88] sm:$0xff]
  %v1091 = vld [vmem:[%s7 + $0x90] sm:$0xff]
  %v1092 = vld [vmem:[%s7 + $0x98] sm:$0xff]
  %v1093 = vld [vmem:[%s7 + $0xa0] sm:$0xff]
  %v1094 = vld [vmem:[%s7 + $0xa8] sm:$0xff]
  %v1095 = vld [vmem:[%s7 + $0xb0] sm:$0xff]
  %v1096 = vld [vmem:[%s7 + $0xb8] sm:$0xff]
  %v1097 = vld [vmem:[%s7 + $0xc0] sm:$0xff]
  %v1098 = vld [vmem:[%s7 + $0xc8] sm:$0xff]
  %v1099 = vld [vmem:[%s7 + $0xd0] sm:$0xff]
  %v1100 = vld [vmem:[%s7 + $0xd8] sm:$0xff]
  %v1101 = vld [vmem:[%s7 + $0xe0] sm:$0xff]
  %v1102 = vld [vmem:[%s7 + $0xe8] sm:$0xff]
  %v1103 = vld [vmem:[%s7 + $0xf0] sm:$0xff]
  %v1104 = vld [vmem:[%s7 + $0xf8] sm:$0xff]
  %v1105 = vld [vmem:[%s7 + $0x100] sm:$0xff]
  %v1106 = vld [vmem:[%s7 + $0x108] sm:$0xff]
  %v1107 = vld [vmem:[%s7 + $0x110] sm:$0xff]
  %v1108 = vld [vmem:[%s7 + $0x118] sm:$0xff]
  %v1109 = vld [vmem:[%s7 + $0x120] sm:$0xff]
  %v1110 = vld [vmem:[%s7 + $0x128] sm:$0xff]
  %v1111 = vld [vmem:[%s7 + $0x130] sm:$0xff]
  %v1112 = vld [vmem:[%s7 + $0x138] sm:$0xff]
  %v1113 = vld [vmem:[%s7 + $0x140] sm:$0xff]
  %v1114 = vld [vmem:[%s7 + $0x148] sm:$0xff]
  %v1115 = vld [vmem:[%s7 + $0x150] sm:$0xff]
  %v1116 = vld [vmem:[%s7 + $0x158] sm:$0xff]
  %v1117 = vld [vmem:[%s7 + $0x160] sm:$0xff]
  %v1118 = vld [vmem:[%s7 + $0x168] sm:$0xff]
  %v1119 = vld [vmem:[%s7 + $0x170] sm:$0xff]
  %v1120 = vld [vmem:[%s7 + $0x178] sm:$0xff]
  %v1121 = vld [vmem:[%s8] sm:$0x1]
  %v1123 = vlaneseq
  %v1124 = vshrl.u32 %v1123, 7
  %v1125 = vsub.s32 0, %v1124
  %v1126 = vrot.slane %v1121, %v1125
  %1128 = vmatprep.subr.mxu0 0.0
  %1129 = vmatpush1.msra.mxu0 %v1073
  %1130 = vmatprep.subr.mxu0 0.0
  %1131 = vmatpush1.msra.mxu0 %v1074
  %1132 = vmatprep.subr.mxu0 0.0
  %1133 = vmatpush1.msra.mxu0 %v1075
  %1134 = vmatprep.subr.mxu0 0.0
  %1135 = vmatpush1.msra.mxu0 %v1076
  %1136 = vmatprep.subr.mxu0 0.0
  %1137 = vmatpush1.msra.mxu0 %v1077
  %1138 = vmatprep.subr.mxu0 0.0
  %1139 = vmatpush1.msra.mxu0 %v1078
  %1140 = vmatprep.subr.mxu0 0.0
  %1141 = vmatpush1.msra.mxu0 %v1079
  %1142 = vmatprep.subr.mxu0 0.0
  %1143 = vmatpush1.msra.mxu0 %v1080
  %1144 = vmatprep.subr.mxu0 0.0
  %1145 = vmatpush1.msra.mxu0 %v1081
  %1146 = vmatprep.subr.mxu0 0.0
  %1147 = vmatpush1.msra.mxu0 %v1082
  %1148 = vmatprep.subr.mxu0 0.0
  %1149 = vmatpush1.msra.mxu0 %v1083
  %1150 = vmatprep.subr.mxu0 0.0
  %1151 = vmatpush1.msra.mxu0 %v1084
  %1152 = vmatprep.subr.mxu0 0.0
  %1153 = vmatpush1.msra.mxu0 %v1085
  %1154 = vmatprep.subr.mxu0 0.0
  %1155 = vmatpush1.msra.mxu0 %v1086
  %1156 = vmatprep.subr.mxu0 0.0
  %1157 = vmatpush1.msra.mxu0 %v1087
  %1158 = vmatprep.subr.mxu0 0.0
  %1159 = vmatpush1.msra.mxu0 %v1088
  %1160 = vmatprep.subr.mxu0 0.0
  %1161 = vmatpush1.msra.mxu0 %v1089
  %1162 = vmatprep.subr.mxu0 0.0
  %1163 = vmatpush1.msra.mxu0 %v1090
  %1164 = vmatprep.subr.mxu0 0.0
  %1165 = vmatpush1.msra.mxu0 %v1091
  %1166 = vmatprep.subr.mxu0 0.0
  %1167 = vmatpush1.msra.mxu0 %v1092
  %1168 = vmatprep.subr.mxu0 0.0
  %1169 = vmatpush1.msra.mxu0 %v1093
  %1170 = vmatprep.subr.mxu0 0.0
  %1171 = vmatpush1.msra.mxu0 %v1094
  %1172 = vmatprep.subr.mxu0 0.0
  %1173 = vmatpush1.msra.mxu0 %v1095
  %1174 = vmatprep.subr.mxu0 0.0
  %1175 = vmatpush1.msra.mxu0 %v1096
  %1176 = vmatprep.subr.mxu0 0.0
  %1177 = vmatpush1.msra.mxu0 %v1097
  %1178 = vmatprep.subr.mxu0 0.0
  %1179 = vmatpush1.msra.mxu0 %v1098
  %1180 = vmatprep.subr.mxu0 0.0
  %1181 = vmatpush1.msra.mxu0 %v1099
  %1182 = vmatprep.subr.mxu0 0.0
  %1183 = vmatpush1.msra.mxu0 %v1100
  %1184 = vmatprep.subr.mxu0 0.0
  %1185 = vmatpush1.msra.mxu0 %v1101
  %1186 = vmatprep.subr.mxu0 0.0
  %1187 = vmatpush1.msra.mxu0 %v1102
  %1188 = vmatprep.subr.mxu0 0.0
  %1189 = vmatpush1.msra.mxu0 %v1103
  %1190 = vmatprep.subr.mxu0 0.0
  %1191 = vmatpush1.msra.mxu0 %v1104
  %1192 = vmatprep.mubr.f32.mxu0 %v1041
  %1193 = vmatmul.mubr.f32.gmra.mrb[0].mxu0 %v1059
  %v1194 = vpop.f32.mrb[0].mxu0
  %v1195 = vadd.f32 %v1126, %v1194
  %v1196 = vpop.f32.mrb[0].mxu0
  %1197 = vmatprep.mubr.f32.mxu0 %v1042
  %1198 = vmatmul.mubr.f32.gmra.mrb[0].mxu0 %v1049
  %v1199 = vpop.f32.mrb[0].mxu0
  %v1200 = vadd.f32 %v1126, %v1199
  %v1201 = vpop.f32.mrb[0].mxu0
  %1202 = vmatprep.mubr.f32.mxu0 %v1043
  %1203 = vmatmul.mubr.f32.gmra.mrb[0].mxu0 %v1060
  %v1204 = vpop.f32.mrb[0].mxu0
  %v1205 = vadd.f32 %v1126, %v1204
  %v1206 = vpop.f32.mrb[0].mxu0
  %1207 = vmatprep.mubr.f32.mxu0 %v1044
  %1208 = vmatmul.mubr.f32.gmra.mrb[0].mxu0 %v1056
  %v1209 = vpop.f32.mrb[0].mxu0
  %v1210 = vadd.f32 %v1126, %v1209
  %v1211 = vpop.f32.mrb[0].mxu0
  %1212 = vdwg.mxu0
  %1213 = vmatprep.subr.mxu0 0.0
  %1214 = vmatpush1.msra.mxu0 %v1105
  %1215 = vmatprep.subr.mxu0 0.0
  %1216 = vmatpush1.msra.mxu0 %v1106
  %1217 = vmatprep.subr.mxu0 0.0
  %1218 = vmatpush1.msra.mxu0 %v1107
  %1219 = vmatprep.subr.mxu0 0.0
  %1220 = vmatpush1.msra.mxu0 %v1108
  %1221 = vmatprep.subr.mxu0 0.0
  %1222 = vmatpush1.msra.mxu0 %v1109
  %1223 = vmatprep.subr.mxu0 0.0
  %1224 = vmatpush1.msra.mxu0 %v1110
  %1225 = vmatprep.subr.mxu0 0.0
  %1226 = vmatpush1.msra.mxu0 %v1111
  %1227 = vmatprep.subr.mxu0 0.0
  %1228 = vmatpush1.msra.mxu0 %v1112
  %1229 = vmatprep.subr.mxu0 0.0
  %1230 = vmatpush1.msra.mxu0 %v1113
  %1231 = vmatprep.subr.mxu0 0.0
  %1232 = vmatpush1.msra.mxu0 %v1114
  %1233 = vmatprep.subr.mxu0 0.0
  %1234 = vmatpush1.msra.mxu0 %v1115
  %1235 = vmatprep.subr.mxu0 0.0
  %1236 = vmatpush1.msra.mxu0 %v1116
  %1237 = vmatprep.subr.mxu0 0.0
  %1238 = vmatpush1.msra.mxu0 %v1117
  %1239 = vmatprep.subr.mxu0 0.0
  %1240 = vmatpush1.msra.mxu0 %v1118
  %1241 = vmatprep.subr.mxu0 0.0
  %1242 = vmatpush1.msra.mxu0 %v1119
  %1243 = vmatprep.subr.mxu0 0.0
  %1244 = vmatpush1.msra.mxu0 %v1120
  %1245 = vmatprep.subr.mxu0 0.0
  %1246 = vmatpush1.msra.mxu0 0.0
  %1247 = vmatprep.subr.mxu0 0.0
  %1248 = vmatpush1.msra.mxu0 0.0
  %1249 = vmatprep.subr.mxu0 0.0
  %1250 = vmatpush1.msra.mxu0 0.0
  %1251 = vmatprep.subr.mxu0 0.0
  %1252 = vmatpush1.msra.mxu0 0.0
  %1253 = vmatprep.subr.mxu0 0.0
  %1254 = vmatpush1.msra.mxu0 0.0
  %1255 = vmatprep.subr.mxu0 0.0
  %1256 = vmatpush1.msra.mxu0 0.0
  %1257 = vmatprep.subr.mxu0 0.0
  %1258 = vmatpush1.msra.mxu0 0.0
  %1259 = vmatprep.subr.mxu0 0.0
  %1260 = vmatpush1.msra.mxu0 0.0
  %1261 = vmatprep.subr.mxu0 0.0
  %1262 = vmatpush1.msra.mxu0 0.0
  %1263 = vmatprep.subr.mxu0 0.0
  %1264 = vmatpush1.msra.mxu0 0.0
  %1265 = vmatprep.subr.mxu0 0.0
  %1266 = vmatpush1.msra.mxu0 0.0
  %1267 = vmatprep.subr.mxu0 0.0
  %1268 = vmatpush1.msra.mxu0 0.0
  %1269 = vmatprep.subr.mxu0 0.0
  %1270 = vmatpush1.msra.mxu0 0.0
  %1271 = vmatprep.subr.mxu0 0.0
  %1272 = vmatpush1.msra.mxu0 0.0
  %1273 = vmatprep.subr.mxu0 0.0
  %1274 = vmatpush1.msra.mxu0 0.0
  %1275 = vmatprep.subr.mxu0 0.0
  %1276 = vmatpush1.msra.mxu0 0.0
  %1277 = vmatprep.mubr.f32.mxu0 0.0
  %1278 = vmatmul.mubr.f32.gmra.mrb[0].mxu0 %v1063
  %v1279 = vpop.f32.mrb[0].mxu0
  %v1280 = vadd.f32 %v1195, %v1279
  %v1281 = vpop.f32.mrb[0].mxu0
  %1282 = vmatprep.mubr.f32.mxu0 0.0
  %1283 = vmatmul.mubr.f32.gmra.mrb[0].mxu0 %v1071
  %v1284 = vpop.f32.mrb[0].mxu0
  %v1285 = vadd.f32 %v1200, %v1284
  %v1286 = vpop.f32.mrb[0].mxu0
  %1287 = vmatprep.mubr.f32.mxu0 0.0
  %1288 = vmatmul.mubr.f32.gmra.mrb[0].mxu0 %v1068
  %v1289 = vpop.f32.mrb[0].mxu0
  %v1290 = vadd.f32 %v1205, %v1289
  %v1291 = vpop.f32.mrb[0].mxu0
  %1292 = vmatprep.mubr.f32.mxu0 0.0
  %1293 = vmatmul.mubr.f32.gmra.mrb[0].mxu0 %v1072
  %v1294 = vpop.f32.mrb[0].mxu0
  %v1295 = vadd.f32 %v1210, %v1294
  %v1296 = vpop.f32.mrb[0].mxu0
  %1297 = vdwg.mxu0
  %v1298 = vmul.f32 %v1280, 0.5
  %v1299 = vmul.f32 %v1285, 0.5
  %v1300 = vmul.f32 %v1290, 0.5
  %v1301 = vmul.f32 %v1295, 0.5
  %v1302 = vmul.f32 %v1280, 0.044715
  %v1303 = vmul.f32 %v1285, 0.044715
  %v1304 = vmul.f32 %v1290, 0.044715
  %v1305 = vmul.f32 %v1295, 0.044715
  %v1306 = vmul.f32 %v1302, %v1280
  %v1307 = vmul.f32 %v1303, %v1285
  %v1308 = vmul.f32 %v1304, %v1290
  %v1309 = vmul.f32 %v1305, %v1295
  %v1310 = vmul.f32 %v1306, %v1280
  %v1311 = vmul.f32 %v1307, %v1285
  %v1312 = vmul.f32 %v1308, %v1290
  %v1313 = vmul.f32 %v1309, %v1295
  %v1314 = vadd.f32 %v1280, %v1310
  %v1315 = vadd.f32 %v1285, %v1311
  %v1316 = vadd.f32 %v1290, %v1312
  %v1317 = vadd.f32 %v1295, %v1313
  %v1318 = vmul.f32 %v1314, 0.7978846
  %v1319 = vmul.f32 %v1315, 0.7978846
  %v1320 = vmul.f32 %v1316, 0.7978846
  %v1321 = vmul.f32 %v1317, 0.7978846
  %v1322 = vtanh.pop %v1318
  %v1323 = vtanh.pop %v1319
  %v1324 = vtanh.pop %v1320
  %v1325 = vtanh.pop %v1321
  %v1326 = vadd.f32 %v1322, 1.0
  %v1327 = vadd.f32 %v1323, 1.0
  %v1328 = vadd.f32 %v1324, 1.0
  %v1329 = vadd.f32 %v1325, 1.0
  %v1330 = vmul.f32 %v1298, %v1326
  %v1331 = vmul.f32 %v1299, %v1327
  %v1332 = vmul.f32 %v1300, %v1328
  %v1333 = vmul.f32 %v1301, %v1329
  %vm1334 = vcmp.ge.f32.partialorder %v1280, 0.0
  %vm1335 = vcmp.ge.f32.partialorder %v1285, 0.0
  %vm1336 = vcmp.ge.f32.partialorder %v1290, 0.0
  %vm1337 = vcmp.ge.f32.partialorder %v1295, 0.0
  %v1338 = vmul.f32 %v1280, 0.2
  %v1339 = vmul.f32 %v1285, 0.2
  %v1340 = vmul.f32 %v1290, 0.2
  %v1341 = vmul.f32 %v1295, 0.2
  %v1342 = vsel %vm1334, %v1280, %v1338
  %v1343 = vsel %vm1335, %v1285, %v1339
  %v1344 = vsel %vm1336, %v1290, %v1340
  %v1345 = vsel %vm1337, %v1295, %v1341
  %v1346 = vmul.f32 %v1342, 0.5267
  %v1347 = vmul.f32 %v1343, 0.5267
  %v1348 = vmul.f32 %v1344, 0.5267
  %v1349 = vmul.f32 %v1345, 0.5267
  %v1350 = vmul.f32 %v1330, 0.4733
  %v1351 = vmul.f32 %v1331, 0.4733
  %v1352 = vmul.f32 %v1332, 0.4733
  %v1353 = vmul.f32 %v1333, 0.4733
  %v1354 = vmul.f32 %v1330, 0.5497
  %v1355 = vmul.f32 %v1331, 0.5497
  %v1356 = vmul.f32 %v1332, 0.5497
  %v1357 = vmul.f32 %v1333, 0.5497
  %v1358 = vadd.f32 %v1346, %v1350
  %v1359 = vadd.f32 %v1347, %v1351
  %v1360 = vadd.f32 %v1348, %v1352
  %v1361 = vadd.f32 %v1349, %v1353
  %vm1362 = vcmp.ge.f32.partialorder %v1358, 0.0
  %vm1363 = vcmp.ge.f32.partialorder %v1359, 0.0
  %vm1364 = vcmp.ge.f32.partialorder %v1360, 0.0
  %vm1365 = vcmp.ge.f32.partialorder %v1361, 0.0
  %v1366 = vmul.f32 %v1358, 0.2
  %v1367 = vmul.f32 %v1359, 0.2
  %v1368 = vmul.f32 %v1360, 0.2
  %v1369 = vmul.f32 %v1361, 0.2
  %v1370 = vsel %vm1362, %v1358, %v1366
  %v1371 = vsel %vm1363, %v1359, %v1367
  %v1372 = vsel %vm1364, %v1360, %v1368
  %v1373 = vsel %vm1365, %v1361, %v1369
  %v1374 = vmul.f32 %v1370, 0.4591
  %v1375 = vmul.f32 %v1371, 0.4591
  %v1376 = vmul.f32 %v1372, 0.4591
  %v1377 = vmul.f32 %v1373, 0.4591
  %v1378 = vadd.f32 %v1374, %v1354
  %v1379 = vadd.f32 %v1375, %v1355
  %v1380 = vadd.f32 %v1376, %v1356
  %v1381 = vadd.f32 %v1377, %v1357
  %v1382 = vadd.f32 %v1378, %v432
  %v1383 = vadd.f32 %v1379, %v434
  %v1384 = vadd.f32 %v1380, %v436
  %v1385 = vadd.f32 %v1381, %v438
  %1386 = vst [vmem:[%s10] sm:$0xff] %v1382
  %1387 = vst [vmem:[%s10 + $0x8] sm:$0xff] %v1383
  %1388 = vst [vmem:[%s10 + $0x10] sm:$0xff] %v1384
  %1389 = vst [vmem:[%s10 + $0x18] sm:$0xff] %v1385
  %v1390 = vld [vmem:[%s10] ss:$2 sm:$0xff]
  %s1391 = scalar_lea.vmem %s10, 1
  %v1392 = vld [vmem:[%s1391] ss:$2 sm:$0xff]
  %s1393 = scalar_lea.vmem %s10, 16
  %v1394 = vld [vmem:[%s1393] ss:$2 sm:$0xff]
  %s1395 = scalar_lea.vmem %s10, 17
  %v1396 = vld [vmem:[%s1395] ss:$2 sm:$0xff]
  %v1398 = vrot.slane %v1392, 7
  %v1400 = vsel %vm43, 0.0, %v1398
  %v1402 = vrot.slane %v1396, 7
  %v1404 = vsel %vm43, 0.0, %v1402
  %v1406 = vrot.slane %v1390, 1
  %v1408 = vsel %vm56, %v1406, 0.0
  %v1410 = vrot.slane %v1394, 1
  %v1412 = vsel %vm56, %v1410, 0.0
  %v1413 = vld [vmem:[%s9] sm:$0xff]
  %v1414 = vld [vmem:[%s9 + $0x8] sm:$0xff]
  %v1415 = vld [vmem:[%s9 + $0x10] sm:$0xff]
  %v1416 = vld [vmem:[%s9 + $0x18] sm:$0xff]
  %v1417 = vld [vmem:[%s9 + $0x20] sm:$0xff]
  %v1418 = vld [vmem:[%s9 + $0x28] sm:$0xff]
  %v1419 = vld [vmem:[%s9 + $0x30] sm:$0xff]
  %v1420 = vld [vmem:[%s9 + $0x38] sm:$0xff]
  %v1421 = vld [vmem:[%s9 + $0x40] sm:$0xff]
  %v1422 = vld [vmem:[%s9 + $0x48] sm:$0xff]
  %v1423 = vld [vmem:[%s9 + $0x50] sm:$0xff]
  %v1424 = vld [vmem:[%s9 + $0x58] sm:$0xff]
  %v1425 = vld [vmem:[%s9 + $0x60] sm:$0xff]
  %v1426 = vld [vmem:[%s9 + $0x68] sm:$0xff]
  %v1427 = vld [vmem:[%s9 + $0x70] sm:$0xff]
  %v1428 = vld [vmem:[%s9 + $0x78] sm:$0xff]
  %v1429 = vld [vmem:[%s9 + $0x80] sm:$0xff]
  %v1430 = vld [vmem:[%s9 + $0x88] sm:$0xff]
  %v1431 = vld [vmem:[%s9 + $0x90] sm:$0xff]
  %v1432 = vld [vmem:[%s9 + $0x98] sm:$0xff]
  %v1433 = vld [vmem:[%s9 + $0xa0] sm:$0xff]
  %v1434 = vld [vmem:[%s9 + $0xa8] sm:$0xff]
  %v1435 = vld [vmem:[%s9 + $0xb0] sm:$0xff]
  %v1436 = vld [vmem:[%s9 + $0xb8] sm:$0xff]
  %v1437 = vld [vmem:[%s9 + $0xc0] sm:$0xff]
  %v1438 = vld [vmem:[%s9 + $0xc8] sm:$0xff]
  %v1439 = vld [vmem:[%s9 + $0xd0] sm:$0xff]
  %v1440 = vld [vmem:[%s9 + $0xd8] sm:$0xff]
  %v1441 = vld [vmem:[%s9 + $0xe0] sm:$0xff]
  %v1442 = vld [vmem:[%s9 + $0xe8] sm:$0xff]
  %v1443 = vld [vmem:[%s9 + $0xf0] sm:$0xff]
  %v1444 = vld [vmem:[%s9 + $0xf8] sm:$0xff]
  %v1445 = vld [vmem:[%s9 + $0x100] sm:$0xff]
  %v1446 = vld [vmem:[%s9 + $0x108] sm:$0xff]
  %v1447 = vld [vmem:[%s9 + $0x110] sm:$0xff]
  %v1448 = vld [vmem:[%s9 + $0x118] sm:$0xff]
  %v1449 = vld [vmem:[%s9 + $0x120] sm:$0xff]
  %v1450 = vld [vmem:[%s9 + $0x128] sm:$0xff]
  %v1451 = vld [vmem:[%s9 + $0x130] sm:$0xff]
  %v1452 = vld [vmem:[%s9 + $0x138] sm:$0xff]
  %v1453 = vld [vmem:[%s9 + $0x140] sm:$0xff]
  %v1454 = vld [vmem:[%s9 + $0x148] sm:$0xff]
  %v1455 = vld [vmem:[%s9 + $0x150] sm:$0xff]
  %v1456 = vld [vmem:[%s9 + $0x158] sm:$0xff]
  %v1457 = vld [vmem:[%s9 + $0x160] sm:$0xff]
  %v1458 = vld [vmem:[%s9 + $0x168] sm:$0xff]
  %v1459 = vld [vmem:[%s9 + $0x170] sm:$0xff]
  %v1460 = vld [vmem:[%s9 + $0x178] sm:$0xff]
  %v1461 = vld [vmem:[%s9 + $0x180] sm:$0xff]
  %v1462 = vld [vmem:[%s9 + $0x188] sm:$0xff]
  %v1463 = vld [vmem:[%s9 + $0x190] sm:$0xff]
  %v1464 = vld [vmem:[%s9 + $0x198] sm:$0xff]
  %v1465 = vld [vmem:[%s9 + $0x1a0] sm:$0xff]
  %v1466 = vld [vmem:[%s9 + $0x1a8] sm:$0xff]
  %v1467 = vld [vmem:[%s9 + $0x1b0] sm:$0xff]
  %v1468 = vld [vmem:[%s9 + $0x1b8] sm:$0xff]
  %v1469 = vld [vmem:[%s9 + $0x1c0] sm:$0xff]
  %v1470 = vld [vmem:[%s9 + $0x1c8] sm:$0xff]
  %v1471 = vld [vmem:[%s9 + $0x1d0] sm:$0xff]
  %v1472 = vld [vmem:[%s9 + $0x1d8] sm:$0xff]
  %v1473 = vld [vmem:[%s9 + $0x1e0] sm:$0xff]
  %v1474 = vld [vmem:[%s9 + $0x1e8] sm:$0xff]
  %v1475 = vld [vmem:[%s9 + $0x1f0] sm:$0xff]
  %v1476 = vld [vmem:[%s9 + $0x1f8] sm:$0xff]
  %v1477 = vld [vmem:[%s9 + $0x200] sm:$0xff]
  %v1478 = vld [vmem:[%s9 + $0x208] sm:$0xff]
  %v1479 = vld [vmem:[%s9 + $0x210] sm:$0xff]
  %v1480 = vld [vmem:[%s9 + $0x218] sm:$0xff]
  %v1481 = vld [vmem:[%s9 + $0x220] sm:$0xff]
  %v1482 = vld [vmem:[%s9 + $0x228] sm:$0xff]
  %v1483 = vld [vmem:[%s9 + $0x230] sm:$0xff]
  %v1484 = vld [vmem:[%s9 + $0x238] sm:$0xff]
  %v1485 = vld [vmem:[%s9 + $0x240] sm:$0xff]
  %v1486 = vld [vmem:[%s9 + $0x248] sm:$0xff]
  %v1487 = vld [vmem:[%s9 + $0x250] sm:$0xff]
  %v1488 = vld [vmem:[%s9 + $0x258] sm:$0xff]
  %v1489 = vld [vmem:[%s9 + $0x260] sm:$0xff]
  %v1490 = vld [vmem:[%s9 + $0x268] sm:$0xff]
  %v1491 = vld [vmem:[%s9 + $0x270] sm:$0xff]
  %v1492 = vld [vmem:[%s9 + $0x278] sm:$0xff]
  %v1493 = vld [vmem:[%s9 + $0x280] sm:$0xff]
  %v1494 = vld [vmem:[%s9 + $0x288] sm:$0xff]
  %v1495 = vld [vmem:[%s9 + $0x290] sm:$0xff]
  %v1496 = vld [vmem:[%s9 + $0x298] sm:$0xff]
  %v1497 = vld [vmem:[%s9 + $0x2a0] sm:$0xff]
  %v1498 = vld [vmem:[%s9 + $0x2a8] sm:$0xff]
  %v1499 = vld [vmem:[%s9 + $0x2b0] sm:$0xff]
  %v1500 = vld [vmem:[%s9 + $0x2b8] sm:$0xff]
  %v1501 = vld [vmem:[%s9 + $0x2c0] sm:$0xff]
  %v1502 = vld [vmem:[%s9 + $0x2c8] sm:$0xff]
  %v1503 = vld [vmem:[%s9 + $0x2d0] sm:$0xff]
  %v1504 = vld [vmem:[%s9 + $0x2d8] sm:$0xff]
  %v1505 = vld [vmem:[%s9 + $0x2e0] sm:$0xff]
  %v1506 = vld [vmem:[%s9 + $0x2e8] sm:$0xff]
  %v1507 = vld [vmem:[%s9 + $0x2f0] sm:$0xff]
  %v1508 = vld [vmem:[%s9 + $0x2f8] sm:$0xff]
  %v1509 = vld [vmem:[%s9 + $0x300] sm:$0xff]
  %v1510 = vld [vmem:[%s9 + $0x308] sm:$0xff]
  %v1511 = vld [vmem:[%s9 + $0x310] sm:$0xff]
  %v1512 = vld [vmem:[%s9 + $0x318] sm:$0xff]
  %v1513 = vld [vmem:[%s9 + $0x320] sm:$0xff]
  %v1514 = vld [vmem:[%s9 + $0x328] sm:$0xff]
  %v1515 = vld [vmem:[%s9 + $0x330] sm:$0xff]
  %v1516 = vld [vmem:[%s9 + $0x338] sm:$0xff]
  %v1517 = vld [vmem:[%s9 + $0x340] sm:$0xff]
  %v1518 = vld [vmem:[%s9 + $0x348] sm:$0xff]
  %v1519 = vld [vmem:[%s9 + $0x350] sm:$0xff]
  %v1520 = vld [vmem:[%s9 + $0x358] sm:$0xff]
  %v1521 = vld [vmem:[%s9 + $0x360] sm:$0xff]
  %v1522 = vld [vmem:[%s9 + $0x368] sm:$0xff]
  %v1523 = vld [vmem:[%s9 + $0x370] sm:$0xff]
  %v1524 = vld [vmem:[%s9 + $0x378] sm:$0xff]
  %v1525 = vld [vmem:[%s9 + $0x380] sm:$0xff]
  %v1526 = vld [vmem:[%s9 + $0x388] sm:$0xff]
  %v1527 = vld [vmem:[%s9 + $0x390] sm:$0xff]
  %v1528 = vld [vmem:[%s9 + $0x398] sm:$0xff]
  %v1529 = vld [vmem:[%s9 + $0x3a0] sm:$0xff]
  %v1530 = vld [vmem:[%s9 + $0x3a8] sm:$0xff]
  %v1531 = vld [vmem:[%s9 + $0x3b0] sm:$0xff]
  %v1532 = vld [vmem:[%s9 + $0x3b8] sm:$0xff]
  %v1533 = vld [vmem:[%s9 + $0x3c0] sm:$0xff]
  %v1534 = vld [vmem:[%s9 + $0x3c8] sm:$0xff]
  %v1535 = vld [vmem:[%s9 + $0x3d0] sm:$0xff]
  %v1536 = vld [vmem:[%s9 + $0x3d8] sm:$0xff]
  %v1537 = vld [vmem:[%s9 + $0x3e0] sm:$0xff]
  %v1538 = vld [vmem:[%s9 + $0x3e8] sm:$0xff]
  %v1539 = vld [vmem:[%s9 + $0x3f0] sm:$0xff]
  %v1540 = vld [vmem:[%s9 + $0x3f8] sm:$0xff]
  %1541 = vmatprep.subr.mxu0 0.0
  %1542 = vmatpush1.msra.mxu0 %v1413
  %1543 = vmatprep.subr.mxu0 0.0
  %1544 = vmatpush1.msra.mxu0 %v1414
  %1545 = vmatprep.subr.mxu0 0.0
  %1546 = vmatpush1.msra.mxu0 %v1415
  %1547 = vmatprep.subr.mxu0 0.0
  %1548 = vmatpush1.msra.mxu0 %v1416
  %1549 = vmatprep.subr.mxu0 0.0
  %1550 = vmatpush1.msra.mxu0 %v1417
  %1551 = vmatprep.subr.mxu0 0.0
  %1552 = vmatpush1.msra.mxu0 %v1418
  %1553 = vmatprep.subr.mxu0 0.0
  %1554 = vmatpush1.msra.mxu0 %v1419
  %1555 = vmatprep.subr.mxu0 0.0
  %1556 = vmatpush1.msra.mxu0 %v1420
  %1557 = vmatprep.subr.mxu0 0.0
  %1558 = vmatpush1.msra.mxu0 %v1421
  %1559 = vmatprep.subr.mxu0 0.0
  %1560 = vmatpush1.msra.mxu0 %v1422
  %1561 = vmatprep.subr.mxu0 0.0
  %1562 = vmatpush1.msra.mxu0 %v1423
  %1563 = vmatprep.subr.mxu0 0.0
  %1564 = vmatpush1.msra.mxu0 %v1424
  %1565 = vmatprep.subr.mxu0 0.0
  %1566 = vmatpush1.msra.mxu0 %v1425
  %1567 = vmatprep.subr.mxu0 0.0
  %1568 = vmatpush1.msra.mxu0 %v1426
  %1569 = vmatprep.subr.mxu0 0.0
  %1570 = vmatpush1.msra.mxu0 %v1427
  %1571 = vmatprep.subr.mxu0 0.0
  %1572 = vmatpush1.msra.mxu0 %v1428
  %1573 = vmatprep.subr.mxu0 0.0
  %1574 = vmatpush1.msra.mxu0 %v1429
  %1575 = vmatprep.subr.mxu0 0.0
  %1576 = vmatpush1.msra.mxu0 %v1430
  %1577 = vmatprep.subr.mxu0 0.0
  %1578 = vmatpush1.msra.mxu0 %v1431
  %1579 = vmatprep.subr.mxu0 0.0
  %1580 = vmatpush1.msra.mxu0 %v1432
  %1581 = vmatprep.subr.mxu0 0.0
  %1582 = vmatpush1.msra.mxu0 %v1433
  %1583 = vmatprep.subr.mxu0 0.0
  %1584 = vmatpush1.msra.mxu0 %v1434
  %1585 = vmatprep.subr.mxu0 0.0
  %1586 = vmatpush1.msra.mxu0 %v1435
  %1587 = vmatprep.subr.mxu0 0.0
  %1588 = vmatpush1.msra.mxu0 %v1436
  %1589 = vmatprep.subr.mxu0 0.0
  %1590 = vmatpush1.msra.mxu0 %v1437
  %1591 = vmatprep.subr.mxu0 0.0
  %1592 = vmatpush1.msra.mxu0 %v1438
  %1593 = vmatprep.subr.mxu0 0.0
  %1594 = vmatpush1.msra.mxu0 %v1439
  %1595 = vmatprep.subr.mxu0 0.0
  %1596 = vmatpush1.msra.mxu0 %v1440
  %1597 = vmatprep.subr.mxu0 0.0
  %1598 = vmatpush1.msra.mxu0 %v1441
  %1599 = vmatprep.subr.mxu0 0.0
  %1600 = vmatpush1.msra.mxu0 %v1442
  %1601 = vmatprep.subr.mxu0 0.0
  %1602 = vmatpush1.msra.mxu0 %v1443
  %1603 = vmatprep.subr.mxu0 0.0
  %1604 = vmatpush1.msra.mxu0 %v1444
  %1605 = vmatprep.mubr.f32.mxu0 %v1404
  %1606 = vmatmul.mubr.f32.gmra.mrb[0].mxu0 %v1400
  %v1607 = vpop.f32.mrb[0].mxu0
  %v1608 = vadd.f32 0.0, %v1607
  %v1609 = vpop.f32.mrb[0].mxu0
  %1610 = vdwg.mxu0
  %1611 = vmatprep.subr.mxu0 0.0
  %1612 = vmatpush1.msra.mxu0 %v1445
  %1613 = vmatprep.subr.mxu0 0.0
  %1614 = vmatpush1.msra.mxu0 %v1446
  %1615 = vmatprep.subr.mxu0 0.0
  %1616 = vmatpush1.msra.mxu0 %v1447
  %1617 = vmatprep.subr.mxu0 0.0
  %1618 = vmatpush1.msra.mxu0 %v1448
  %1619 = vmatprep.subr.mxu0 0.0
  %1620 = vmatpush1.msra.mxu0 %v1449
  %1621 = vmatprep.subr.mxu0 0.0
  %1622 = vmatpush1.msra.mxu0 %v1450
  %1623 = vmatprep.subr.mxu0 0.0
  %1624 = vmatpush1.msra.mxu0 %v1451
  %1625 = vmatprep.subr.mxu0 0.0
  %1626 = vmatpush1.msra.mxu0 %v1452
  %1627 = vmatprep.subr.mxu0 0.0
  %1628 = vmatpush1.msra.mxu0 %v1453
  %1629 = vmatprep.subr.mxu0 0.0
  %1630 = vmatpush1.msra.mxu0 %v1454
  %1631 = vmatprep.subr.mxu0 0.0
  %1632 = vmatpush1.msra.mxu0 %v1455
  %1633 = vmatprep.subr.mxu0 0.0
  %1634 = vmatpush1.msra.mxu0 %v1456
  %1635 = vmatprep.subr.mxu0 0.0
  %1636 = vmatpush1.msra.mxu0 %v1457
  %1637 = vmatprep.subr.mxu0 0.0
  %1638 = vmatpush1.msra.mxu0 %v1458
  %1639 = vmatprep.subr.mxu0 0.0
  %1640 = vmatpush1.msra.mxu0 %v1459
  %1641 = vmatprep.subr.mxu0 0.0
  %1642 = vmatpush1.msra.mxu0 %v1460
  %1643 = vmatprep.subr.mxu0 0.0
  %1644 = vmatpush1.msra.mxu0 %v1461
  %1645 = vmatprep.subr.mxu0 0.0
  %1646 = vmatpush1.msra.mxu0 %v1462
  %1647 = vmatprep.subr.mxu0 0.0
  %1648 = vmatpush1.msra.mxu0 %v1463
  %1649 = vmatprep.subr.mxu0 0.0
  %1650 = vmatpush1.msra.mxu0 %v1464
  %1651 = vmatprep.subr.mxu0 0.0
  %1652 = vmatpush1.msra.mxu0 %v1465
  %1653 = vmatprep.subr.mxu0 0.0
  %1654 = vmatpush1.msra.mxu0 %v1466
  %1655 = vmatprep.subr.mxu0 0.0
  %1656 = vmatpush1.msra.mxu0 %v1467
  %1657 = vmatprep.subr.mxu0 0.0
  %1658 = vmatpush1.msra.mxu0 %v1468
  %1659 = vmatprep.subr.mxu0 0.0
  %1660 = vmatpush1.msra.mxu0 %v1469
  %1661 = vmatprep.subr.mxu0 0.0
  %1662 = vmatpush1.msra.mxu0 %v1470
  %1663 = vmatprep.subr.mxu0 0.0
  %1664 = vmatpush1.msra.mxu0 %v1471
  %1665 = vmatprep.subr.mxu0 0.0
  %1666 = vmatpush1.msra.mxu0 %v1472
  %1667 = vmatprep.subr.mxu0 0.0
  %1668 = vmatpush1.msra.mxu0 %v1473
  %1669 = vmatprep.subr.mxu0 0.0
  %1670 = vmatpush1.msra.mxu0 %v1474
  %1671 = vmatprep.subr.mxu0 0.0
  %1672 = vmatpush1.msra.mxu0 %v1475
  %1673 = vmatprep.subr.mxu0 0.0
  %1674 = vmatpush1.msra.mxu0 %v1476
  %1675 = vmatprep.mubr.f32.mxu0 %v1394
  %1676 = vmatmul.mubr.f32.gmra.mrb[0].mxu0 %v1390
  %v1677 = vpop.f32.mrb[0].mxu0
  %v1678 = vadd.f32 %v1608, %v1677
  %v1679 = vpop.f32.mrb[0].mxu0
  %1680 = vdwg.mxu0
  %1681 = vmatprep.subr.mxu0 0.0
  %1682 = vmatpush1.msra.mxu0 %v1477
  %1683 = vmatprep.subr.mxu0 0.0
  %1684 = vmatpush1.msra.mxu0 %v1478
  %1685 = vmatprep.subr.mxu0 0.0
  %1686 = vmatpush1.msra.mxu0 %v1479
  %1687 = vmatprep.subr.mxu0 0.0
  %1688 = vmatpush1.msra.mxu0 %v1480
  %1689 = vmatprep.subr.mxu0 0.0
  %1690 = vmatpush1.msra.mxu0 %v1481
  %1691 = vmatprep.subr.mxu0 0.0
  %1692 = vmatpush1.msra.mxu0 %v1482
  %1693 = vmatprep.subr.mxu0 0.0
  %1694 = vmatpush1.msra.mxu0 %v1483
  %1695 = vmatprep.subr.mxu0 0.0
  %1696 = vmatpush1.msra.mxu0 %v1484
  %1697 = vmatprep.subr.mxu0 0.0
  %1698 = vmatpush1.msra.mxu0 %v1485
  %1699 = vmatprep.subr.mxu0 0.0
  %1700 = vmatpush1.msra.mxu0 %v1486
  %1701 = vmatprep.subr.mxu0 0.0
  %1702 = vmatpush1.msra.mxu0 %v1487
  %1703 = vmatprep.subr.mxu0 0.0
  %1704 = vmatpush1.msra.mxu0 %v1488
  %1705 = vmatprep.subr.mxu0 0.0
  %1706 = vmatpush1.msra.mxu0 %v1489
  %1707 = vmatprep.subr.mxu0 0.0
  %1708 = vmatpush1.msra.mxu0 %v1490
  %1709 = vmatprep.subr.mxu0 0.0
  %1710 = vmatpush1.msra.mxu0 %v1491
  %1711 = vmatprep.subr.mxu0 0.0
  %1712 = vmatpush1.msra.mxu0 %v1492
  %1713 = vmatprep.subr.mxu0 0.0
  %1714 = vmatpush1.msra.mxu0 %v1493
  %1715 = vmatprep.subr.mxu0 0.0
  %1716 = vmatpush1.msra.mxu0 %v1494
  %1717 = vmatprep.subr.mxu0 0.0
  %1718 = vmatpush1.msra.mxu0 %v1495
  %1719 = vmatprep.subr.mxu0 0.0
  %1720 = vmatpush1.msra.mxu0 %v1496
  %1721 = vmatprep.subr.mxu0 0.0
  %1722 = vmatpush1.msra.mxu0 %v1497
  %1723 = vmatprep.subr.mxu0 0.0
  %1724 = vmatpush1.msra.mxu0 %v1498
  %1725 = vmatprep.subr.mxu0 0.0
  %1726 = vmatpush1.msra.mxu0 %v1499
  %1727 = vmatprep.subr.mxu0 0.0
  %1728 = vmatpush1.msra.mxu0 %v1500
  %1729 = vmatprep.subr.mxu0 0.0
  %1730 = vmatpush1.msra.mxu0 %v1501
  %1731 = vmatprep.subr.mxu0 0.0
  %1732 = vmatpush1.msra.mxu0 %v1502
  %1733 = vmatprep.subr.mxu0 0.0
  %1734 = vmatpush1.msra.mxu0 %v1503
  %1735 = vmatprep.subr.mxu0 0.0
  %1736 = vmatpush1.msra.mxu0 %v1504
  %1737 = vmatprep.subr.mxu0 0.0
  %1738 = vmatpush1.msra.mxu0 %v1505
  %1739 = vmatprep.subr.mxu0 0.0
  %1740 = vmatpush1.msra.mxu0 %v1506
  %1741 = vmatprep.subr.mxu0 0.0
  %1742 = vmatpush1.msra.mxu0 %v1507
  %1743 = vmatprep.subr.mxu0 0.0
  %1744 = vmatpush1.msra.mxu0 %v1508
  %1745 = vmatprep.mubr.f32.mxu0 %v1396
  %1746 = vmatmul.mubr.f32.gmra.mrb[0].mxu0 %v1392
  %v1747 = vpop.f32.mrb[0].mxu0
  %v1748 = vadd.f32 %v1678, %v1747
  %v1749 = vpop.f32.mrb[0].mxu0
  %1750 = vdwg.mxu0
  %1751 = vmatprep.subr.mxu0 0.0
  %1752 = vmatpush1.msra.mxu0 %v1509
  %1753 = vmatprep.subr.mxu0 0.0
  %1754 = vmatpush1.msra.mxu0 %v1510
  %1755 = vmatprep.subr.mxu0 0.0
  %1756 = vmatpush1.msra.mxu0 %v1511
  %1757 = vmatprep.subr.mxu0 0.0
  %1758 = vmatpush1.msra.mxu0 %v1512
  %1759 = vmatprep.subr.mxu0 0.0
  %1760 = vmatpush1.msra.mxu0 %v1513
  %1761 = vmatprep.subr.mxu0 0.0
  %1762 = vmatpush1.msra.mxu0 %v1514
  %1763 = vmatprep.subr.mxu0 0.0
  %1764 = vmatpush1.msra.mxu0 %v1515
  %1765 = vmatprep.subr.mxu0 0.0
  %1766 = vmatpush1.msra.mxu0 %v1516
  %1767 = vmatprep.subr.mxu0 0.0
  %1768 = vmatpush1.msra.mxu0 %v1517
  %1769 = vmatprep.subr.mxu0 0.0
  %1770 = vmatpush1.msra.mxu0 %v1518
  %1771 = vmatprep.subr.mxu0 0.0
  %1772 = vmatpush1.msra.mxu0 %v1519
  %1773 = vmatprep.subr.mxu0 0.0
  %1774 = vmatpush1.msra.mxu0 %v1520
  %1775 = vmatprep.subr.mxu0 0.0
  %1776 = vmatpush1.msra.mxu0 %v1521
  %1777 = vmatprep.subr.mxu0 0.0
  %1778 = vmatpush1.msra.mxu0 %v1522
  %1779 = vmatprep.subr.mxu0 0.0
  %1780 = vmatpush1.msra.mxu0 %v1523
  %1781 = vmatprep.subr.mxu0 0.0
  %1782 = vmatpush1.msra.mxu0 %v1524
  %1783 = vmatprep.subr.mxu0 0.0
  %1784 = vmatpush1.msra.mxu0 %v1525
  %1785 = vmatprep.subr.mxu0 0.0
  %1786 = vmatpush1.msra.mxu0 %v1526
  %1787 = vmatprep.subr.mxu0 0.0
  %1788 = vmatpush1.msra.mxu0 %v1527
  %1789 = vmatprep.subr.mxu0 0.0
  %1790 = vmatpush1.msra.mxu0 %v1528
  %1791 = vmatprep.subr.mxu0 0.0
  %1792 = vmatpush1.msra.mxu0 %v1529
  %1793 = vmatprep.subr.mxu0 0.0
  %1794 = vmatpush1.msra.mxu0 %v1530
  %1795 = vmatprep.subr.mxu0 0.0
  %1796 = vmatpush1.msra.mxu0 %v1531
  %1797 = vmatprep.subr.mxu0 0.0
  %1798 = vmatpush1.msra.mxu0 %v1532
  %1799 = vmatprep.subr.mxu0 0.0
  %1800 = vmatpush1.msra.mxu0 %v1533
  %1801 = vmatprep.subr.mxu0 0.0
  %1802 = vmatpush1.msra.mxu0 %v1534
  %1803 = vmatprep.subr.mxu0 0.0
  %1804 = vmatpush1.msra.mxu0 %v1535
  %1805 = vmatprep.subr.mxu0 0.0
  %1806 = vmatpush1.msra.mxu0 %v1536
  %1807 = vmatprep.subr.mxu0 0.0
  %1808 = vmatpush1.msra.mxu0 %v1537
  %1809 = vmatprep.subr.mxu0 0.0
  %1810 = vmatpush1.msra.mxu0 %v1538
  %1811 = vmatprep.subr.mxu0 0.0
  %1812 = vmatpush1.msra.mxu0 %v1539
  %1813 = vmatprep.subr.mxu0 0.0
  %1814 = vmatpush1.msra.mxu0 %v1540
  %1815 = vmatprep.mubr.f32.mxu0 %v1412
  %1816 = vmatmul.mubr.f32.gmra.mrb[0].mxu0 %v1408
  %v1817 = vpop.f32.mrb[0].mxu0
  %v1818 = vadd.f32 %v1748, %v1817
  %v1819 = vpop.f32.mrb[0].mxu0
  %1820 = vdwg.mxu0
  %1821 = vst [vmem:[%s11] sm:$0xff] %v1818
  // Predicated region
  $region42: #{unet_conv_block.1} parent=0 // pred_check
    _
  $region43: #{unet_conv_block.1} parent=0 // pred_check_branch
    %1823 = sbr.rel (0) target = $region45
  $region44: #{unet_conv_block.1} parent=0 // pred_region
    _
  $region45: #{unet_conv_block.1} parent=0 // pred_fallthru
    _
  // Predicated region
  $region46: #{unet_conv_block.1} parent=0 // pred_check
    _
  $region47: #{unet_conv_block.1} parent=0 // pred_check_branch
    %1825 = sbr.rel (0) target = $region49
  $region48: #{unet_conv_block.1} parent=0 // pred_region
    _
  $region49: #{unet_conv_block.1} parent=0 // pred_fallthru
    _
  // Predicated region
  $region50: #{unet_conv_block.1} parent=0 // pred_check
    _
  $region51: #{unet_conv_block.1} parent=0 // pred_check_branch
    %1827 = sbr.rel (0) target = $region53
  $region52: #{unet_conv_block.1} parent=0 // pred_region
    _
  $region53: #{unet_conv_block.1} parent=0 // pred_fallthru
    _
  // Predicated region
  $region54: #{unet_conv_block.1} parent=0 // pred_check
    _
  $region55: #{unet_conv_block.1} parent=0 // pred_check_branch
    %1829 = sbr.rel (0) target = $region57
  $region56: #{unet_conv_block.1} parent=0 // pred_region
    _
  $region57: #{unet_conv_block.1} parent=0 // pred_fallthru
    _

</llo_original>
